<compile_context>
chip_gen: v7x
topology: tpu7x:2x2x1
jax: 0.10.0
libtpu: 0.0.40
codegen_flags: <defaults>
</compile_context>

<pallas_src>
import math

import jax
import jax.numpy as jnp
from jax.experimental import pallas as pl
from jax.experimental.pallas import tpu as pltpu


def _round_up(x, m):
    return ((x + m - 1) // m) * m


def _cdiv(a, b):
    return -(-a // b)


def _gelu_exact(x):
    # PyTorch F.gelu default is the exact (erf) formulation.
    return 0.5 * x * (1.0 + jax.lax.erf(x * (1.0 / math.sqrt(2.0))))


def _fold_bn(gamma, beta, mean, var, eps=1e-5):
    scale = gamma / jnp.sqrt(var + eps)
    bias = beta - mean * scale
    return scale.astype(jnp.float32), bias.astype(jnp.float32)


def prepare_params(conv1_w, bn1, conv2_w, bn2, eps=1e-5):
    """Fold BN (inference mode) and lay weights out for the fused kernel.

    conv1_w: (Cmid, Cin, 3, 3) PyTorch layout; conv2_w: (Cout, Cmid, 1, 1).
    bn1/bn2: (gamma, beta, running_mean, running_var) tuples.

    Returns:
      w1t: (9, Cmid, Cin_pad) bf16 per-tap conv1 weights, bn1 scale folded in
      b1 : (Cmid, 1)  f32 bn1 bias
      w2t: (Cout, Cmid) bf16 1x1 conv weights
      s2 : (Cout, 1)  f32 bn2 scale (applied AFTER the 2-bit quantizer)
      b2 : (Cout, 1)  f32 bn2 bias
    """
    Cmid, Cin, kh, kw = conv1_w.shape
    assert (kh, kw) == (3, 3)
    Cout = conv2_w.shape[0]
    cin_pad = _round_up(Cin, 8)                       # full bf16 sublane groups

    s1, b1 = _fold_bn(*bn1, eps)
    s2, b2 = _fold_bn(*bn2, eps)

    # (Cmid, Cin, 3, 3) -> (3, 3, Cmid, Cin) -> (9, Cmid, Cin): tap index = ky*3 + kx,
    # matching the in-kernel band offsets ky*(W+2)+kx.
    w1 = jnp.transpose(conv1_w, (2, 3, 0, 1)).reshape(9, Cmid, Cin)
    w1 = w1 * s1[None, :, None]                       # fold bn1 scale into the weight
    w1 = jnp.pad(w1, ((0, 0), (0, 0), (0, cin_pad - Cin))).astype(jnp.bfloat16)

    w2 = conv2_w.reshape(Cout, Cmid).astype(jnp.bfloat16)
    return (w1,
            b1.reshape(Cmid, 1).astype(jnp.float32),
            w2,
            s2.reshape(Cout, 1).astype(jnp.float32),
            b2.reshape(Cout, 1).astype(jnp.float32))


def _make_kernel(tap_offsets, tm, cin_pad, cmid):
    """Builds the fused kernel closed over static tile geometry."""

    def kernel(xm_ref, xh_ref, w1_ref, b1_ref, w2_ref, s2_ref, b2_ref, o_ref):
        # xm_ref: (Cin_pad, tm)        bf16  main pixel band (anchors of this tile)
        # xh_ref: (Cin_pad, halo_pad)  bf16  halo immediately following the band
        # w1_ref: (9, Cmid, Cin_pad)   bf16  per-tap conv1 weights (bn1 scale folded)
        # b1_ref: (Cmid, 1)            f32   bn1 bias
        # w2_ref: (Cout, Cmid)         bf16  conv2 (1x1) weights
        # s2_ref, b2_ref: (Cout, 1)    f32   bn2 scale / bias (post-quantizer)
        # o_ref : (Cout, tm)           f32   lane-dense output stripe
        band = jnp.concatenate([xm_ref[...], xh_ref[...]], axis=1)   # (Cin_pad, tm+halo_pad)

        acc = jnp.zeros((cmid, tm), jnp.float32)
        for k, off in enumerate(tap_offsets):
            tap = jax.lax.slice(band, (0, off), (cin_pad, off + tm))  # in-VMEM im2col tap
            acc = acc + jnp.dot(w1_ref[k], tap, preferred_element_type=jnp.float32)

        h = _gelu_exact(acc + b1_ref[...])                            # bn1 bias + GELU
        y = jnp.dot(w2_ref[...], h.astype(jnp.bfloat16),
                    preferred_element_type=jnp.float32)               # (Cout, tm)

        # TODO(synk): activation_quantize_fn2 assumed DoReFa-style 2-bit act quantization.
        n_levels = 3.0                                                # 2**2 - 1
        q = jnp.round(jnp.clip(y, 0.0, 1.0) * n_levels) * (1.0 / n_levels)
        o_ref[...] = q * s2_ref[...] + b2_ref[...]                    # bn2

    return kernel


def _prefer_even_grid():
    """True on v7x-class chips (2 TensorCores share the grid)."""
    try:
        kind = jax.devices()[0].device_kind.lower()
        return ("v7" in kind) or ("7x" in kind)
    except Exception:
        return False


def _pick_tile(m_valid, cin_pad, cmid, cout, halo_pad,
               budget_bytes=16 * 1024 * 1024, cap=8192, prefer_even=False):
    """Largest tm (multiple of halo_pad) whose per-step VMEM footprint fits the budget."""

    def footprint(tm):
        x_io = 2 * cin_pad * tm * 2 + 2 * cin_pad * halo_pad * 2      # dbl-buffered x DMAs
        out_io = 2 * cout * tm * 4                                    # dbl-buffered output
        band = cin_pad * (tm + halo_pad) * 2 + 2 * cin_pad * tm * 2   # band + live taps
        acc = cmid * tm * 4 + cmid * tm * 2 + cout * tm * 8           # f32 acc, bf16 h, y/q
        wts = 2 * (9 * cmid * cin_pad * 2 + cmid * 4 + cout * cmid * 2 + 2 * cout * 4)
        return x_io + out_io + band + acc + wts

    tm_cap = min(_round_up(cap, halo_pad), max(halo_pad, _round_up(m_valid, halo_pad)))
    tm = halo_pad
    t = halo_pad
    while t <= tm_cap:
        if footprint(t) <= budget_bytes:
            tm = t
        t += halo_pad

    grid = _cdiv(m_valid, tm)
    if prefer_even and grid % 2 == 1:
        tm = _round_up(_cdiv(m_valid, grid + 1), halo_pad)
        grid = _cdiv(m_valid, tm)
        if grid % 2 == 1:            # accept one extra (all-padding) tile to stay even
            grid += 1
    return tm, grid


def block_resnet(x_nchw, kparams, tm=None):
    """x_nchw: (N, Cin, H, W) float32. Returns (N, Cout, H, W) float32."""
    w1t, b1, w2t, s2, b2 = kparams
    _, cmid, cin_pad = w1t.shape
    cout = w2t.shape[0]
    N, Cin, H, W = x_nchw.shape

    Hp, Wp = H + 2, W + 2                       # zero-padded spatial grid (pad=1)
    m_valid = N * Hp * Wp                       # anchors over the padded grid
    halo = 2 * Wp + 2                           # max tap offset from an anchor
    halo_pad = _round_up(halo, 128)             # lane-aligned halo block

    if tm is None:
        tm, grid = _pick_tile(m_valid, cin_pad, cmid, cout, halo_pad,
                              prefer_even=_prefer_even_grid())
    else:
        assert tm % halo_pad == 0, "tm must be a multiple of the halo block width"
        grid = _cdiv(m_valid, tm)
    m_anchor = grid * tm
    mp_alloc = m_anchor + halo_pad
    ratio = tm // halo_pad

    # Channel-major, spatially zero-padded, bf16 input slab (cast FIRST so the prologue
    # pad/transpose/reshape moves bf16, not f32).
    xb = x_nchw.astype(jnp.bfloat16)
    xp = jnp.pad(xb, ((0, 0), (0, cin_pad - Cin), (1, 1), (1, 1)))       # (N,Cin_pad,Hp,Wp)
    x_flat = jnp.transpose(xp, (1, 0, 2, 3)).reshape(cin_pad, m_valid)
    x_flat = jnp.pad(x_flat, ((0, 0), (0, mp_alloc - m_valid)))          # tail zeros

    tap_offsets = [ky * Wp + kx for ky in range(3) for kx in range(3)]
    kernel = _make_kernel(tap_offsets, tm, cin_pad, cmid)

    const3 = lambda i: (0, 0, 0)
    const2 = lambda i: (0, 0)

    flops = 2 * m_anchor * (cmid * 9 * cin_pad + cout * cmid)
    bytes_accessed = (cin_pad * mp_alloc * 2 + grid * cin_pad * halo_pad * 2
                      + int(w1t.size) * 2 + int(w2t.size) * 2
                      + (int(b1.size) + int(s2.size) + int(b2.size)) * 4
                      + cout * m_anchor * 4)

    out_t = pl.pallas_call(
        kernel,
        out_shape=jax.ShapeDtypeStruct((cout, m_anchor), jnp.float32),
        grid=(grid,),
        in_specs=[
            pl.BlockSpec((cin_pad, tm), lambda i: (0, i)),                     # pixel band
            pl.BlockSpec((cin_pad, halo_pad), lambda i: (0, (i + 1) * ratio)), # halo block
            pl.BlockSpec((9, cmid, cin_pad), const3),                          # conv1+bn1 w
            pl.BlockSpec((cmid, 1), const2),                                   # bn1 bias
            pl.BlockSpec((cout, cmid), const2),                                # conv2 w
            pl.BlockSpec((cout, 1), const2),                                   # bn2 scale
            pl.BlockSpec((cout, 1), const2),                                   # bn2 bias
        ],
        out_specs=pl.BlockSpec((cout, tm), lambda i: (0, i)),
        compiler_params=pltpu.CompilerParams(
            dimension_semantics=("parallel",),
            vmem_limit_bytes=32 * 1024 * 1024,
        ),
        cost_estimate=pl.CostEstimate(
            flops=int(flops),
            transcendentals=int(m_anchor * cmid),
            bytes_accessed=int(bytes_accessed),
        ),
    )(x_flat, x_flat, w1t, b1, w2t, s2, b2)

    # Extract the valid H x W region of the padded-anchor grid.
    out = out_t[:, :m_valid].reshape(cout, N, Hp, Wp)[:, :, :H, :W]
    # TODO(synk): when the consumer is another channel-major block, return (Cout, N*H*W)
    #             directly (skip this NCHW transpose) to save an HBM pass.
    return jnp.transpose(out, (1, 0, 2, 3))


def _reference(x_nchw, kparams):
    """Plain-JAX reference using the same folded-BN / bf16-operand math (wrapper im2col)."""
    w1t, b1, w2t, s2, b2 = kparams
    _, cmid, cin_pad = w1t.shape
    cout = w2t.shape[0]
    N, Cin, H, W = x_nchw.shape

    xb = x_nchw.astype(jnp.bfloat16)
    xp = jnp.pad(xb, ((0, 0), (0, cin_pad - Cin), (1, 1), (1, 1)))
    acc = jnp.zeros((cmid, N * H * W), jnp.float32)
    k = 0
    for ky in range(3):
        for kx in range(3):
            tap = jnp.transpose(xp[:, :, ky:ky + H, kx:kx + W],
                                (1, 0, 2, 3)).reshape(cin_pad, N * H * W)
            acc = acc + jnp.dot(w1t[k], tap, preferred_element_type=jnp.float32)
            k += 1
    h = _gelu_exact(acc + b1)
    y = jnp.dot(w2t, h.astype(jnp.bfloat16), preferred_element_type=jnp.float32)
    q = jnp.round(jnp.clip(y, 0.0, 1.0) * 3.0) / 3.0
    out = (q * s2 + b2).reshape(cout, N, H, W)
    return jnp.transpose(out, (1, 0, 2, 3))


def make_params(key, in_planes, out_planes, t=8):
    Cmid = t * in_planes
    ks = jax.random.split(key, 10)
    conv1_w = jax.random.normal(ks[0], (Cmid, in_planes, 3, 3), jnp.float32) * 0.1
    conv2_w = jax.random.normal(ks[1], (out_planes, Cmid, 1, 1), jnp.float32) * 0.1

    def bn(k0, k1, k2, k3, c):
        gamma = jax.random.uniform(k0, (c,), jnp.float32, minval=0.5, maxval=1.5)
        beta = jax.random.normal(k1, (c,), jnp.float32) * 0.1
        mean = jax.random.normal(k2, (c,), jnp.float32) * 0.1
        var = jax.random.uniform(k3, (c,), jnp.float32, minval=0.5, maxval=1.5)
        return (gamma, beta, mean, var)

    bn1 = bn(ks[2], ks[3], ks[4], ks[5], Cmid)
    bn2 = bn(ks[6], ks[7], ks[8], ks[9], out_planes)
    return conv1_w, bn1, conv2_w, bn2


if __name__ == "__main__":
    key = jax.random.PRNGKey(0)
    k_x, k_p = jax.random.split(key)

    N, Cin, H, W = 2, 4, 16, 16
    out_planes, t = 8, 8

    x = jax.random.normal(k_x, (N, Cin, H, W), jnp.float32)
    conv1_w, bn1, conv2_w, bn2 = make_params(k_p, Cin, out_planes, t=t)
    kparams = prepare_params(conv1_w, bn1, conv2_w, bn2)

    y = jax.block_until_ready(block_resnet(x, kparams))
    assert y.shape == (N, out_planes, H, W)

    y_ref = jax.block_until_ready(_reference(x, kparams))
    # allow the (extremely rare) quantization-boundary flip from different f32 accumulation order
    match = jnp.mean((jnp.abs(y - y_ref) < 1e-3).astype(jnp.float32))
    assert float(match) > 0.99, f"mismatch fraction too high: {1.0 - float(match)}"

    print("KERNEL_OK")
</pallas_src>

<mosaic_0001>
module attributes {stable_mosaic.version = 11 : i64} {
  func.func @kernel(%arg0: i32, %arg1: memref<8x768xbf16, #tpu.memory_space<vmem>>, %arg2: memref<8x128xbf16, #tpu.memory_space<vmem>>, %arg3: memref<9x32x8xbf16, #tpu.memory_space<vmem>>, %arg4: memref<32x1xf32, #tpu.memory_space<vmem>>, %arg5: memref<8x32xbf16, #tpu.memory_space<vmem>>, %arg6: memref<8x1xf32, #tpu.memory_space<vmem>>, %arg7: memref<8x1xf32, #tpu.memory_space<vmem>>, %arg8: memref<8x768xf32, #tpu.memory_space<vmem>>) attributes {dimension_semantics = [#tpu.dimension_semantics<parallel>], iteration_bounds = array<i64: 1>, scalar_prefetch = 0 : i64, scratch_operands = 0 : i64, tpu.core_type = #tpu.core_type<tc>, window_params = [{transform_indices = @transform_0, window_bounds = array<i64: 8, 768>}, {transform_indices = @transform_1, window_bounds = array<i64: 8, 128>}, {pipeline_mode = #tpu.pipeline_mode<synchronous>, transform_indices = @transform_2, window_bounds = array<i64: 9, 32, 8>}, {pipeline_mode = #tpu.pipeline_mode<synchronous>, transform_indices = @transform_3, window_bounds = array<i64: 32, 1>}, {pipeline_mode = #tpu.pipeline_mode<synchronous>, transform_indices = @transform_4, window_bounds = array<i64: 8, 32>}, {pipeline_mode = #tpu.pipeline_mode<synchronous>, transform_indices = @transform_5, window_bounds = array<i64: 8, 1>}, {pipeline_mode = #tpu.pipeline_mode<synchronous>, transform_indices = @transform_6, window_bounds = array<i64: 8, 1>}, {transform_indices = @transform_7, window_bounds = array<i64: 8, 768>}]} {
    %c0 = arith.constant 0 : index
    %c0_0 = arith.constant 0 : index
    %0 = vector.load %arg1[%c0, %c0_0] : memref<8x768xbf16, #tpu.memory_space<vmem>>, vector<8x768xbf16>
    %c0_1 = arith.constant 0 : index
    %c0_2 = arith.constant 0 : index
    %1 = vector.load %arg2[%c0_1, %c0_2] : memref<8x128xbf16, #tpu.memory_space<vmem>>, vector<8x128xbf16>
    %2 = tpu.concatenate %0, %1 in 1 : vector<8x768xbf16>, vector<8x128xbf16> -> vector<8x896xbf16>
    %cst = arith.constant 0.000000e+00 : f32
    %3 = vector.broadcast %cst : f32 to vector<32x768xf32>
    %4 = vector.extract_strided_slice %2 {offsets = [0, 0], sizes = [8, 768], strides = [1, 1]} : vector<8x896xbf16> to vector<8x768xbf16>
    %c0_3 = arith.constant 0 : index
    %c0_4 = arith.constant 0 : index
    %c0_5 = arith.constant 0 : index
    %5 = vector.load %arg3[%c0_3, %c0_4, %c0_5] : memref<9x32x8xbf16, #tpu.memory_space<vmem>>, vector<1x32x8xbf16>
    %6 = vector.shape_cast %5 : vector<1x32x8xbf16> to vector<32x8xbf16>
    %cst_6 = arith.constant dense<0.000000e+00> : vector<32x768xf32>
    %7 = tpu.matmul %6, %4, %cst_6 {dimension_numbers = #tpu.dot_dimension_numbers<[1], [0], [0], [1], [0, 0, 1, 1], [], []>} : vector<32x8xbf16>, vector<8x768xbf16>, vector<32x768xf32> -> vector<32x768xf32>
    %8 = arith.addf %3, %7 : vector<32x768xf32>
    %9 = vector.extract_strided_slice %2 {offsets = [0, 1], sizes = [8, 768], strides = [1, 1]} : vector<8x896xbf16> to vector<8x768xbf16>
    %c1 = arith.constant 1 : index
    %c0_7 = arith.constant 0 : index
    %c0_8 = arith.constant 0 : index
    %10 = vector.load %arg3[%c1, %c0_7, %c0_8] : memref<9x32x8xbf16, #tpu.memory_space<vmem>>, vector<1x32x8xbf16>
    %11 = vector.shape_cast %10 : vector<1x32x8xbf16> to vector<32x8xbf16>
    %cst_9 = arith.constant dense<0.000000e+00> : vector<32x768xf32>
    %12 = tpu.matmul %11, %9, %cst_9 {dimension_numbers = #tpu.dot_dimension_numbers<[1], [0], [0], [1], [0, 0, 1, 1], [], []>} : vector<32x8xbf16>, vector<8x768xbf16>, vector<32x768xf32> -> vector<32x768xf32>
    %13 = arith.addf %8, %12 : vector<32x768xf32>
    %14 = vector.extract_strided_slice %2 {offsets = [0, 2], sizes = [8, 768], strides = [1, 1]} : vector<8x896xbf16> to vector<8x768xbf16>
    %c2 = arith.constant 2 : index
    %c0_10 = arith.constant 0 : index
    %c0_11 = arith.constant 0 : index
    %15 = vector.load %arg3[%c2, %c0_10, %c0_11] : memref<9x32x8xbf16, #tpu.memory_space<vmem>>, vector<1x32x8xbf16>
    %16 = vector.shape_cast %15 : vector<1x32x8xbf16> to vector<32x8xbf16>
    %cst_12 = arith.constant dense<0.000000e+00> : vector<32x768xf32>
    %17 = tpu.matmul %16, %14, %cst_12 {dimension_numbers = #tpu.dot_dimension_numbers<[1], [0], [0], [1], [0, 0, 1, 1], [], []>} : vector<32x8xbf16>, vector<8x768xbf16>, vector<32x768xf32> -> vector<32x768xf32>
    %18 = arith.addf %13, %17 : vector<32x768xf32>
    %19 = vector.extract_strided_slice %2 {offsets = [0, 18], sizes = [8, 768], strides = [1, 1]} : vector<8x896xbf16> to vector<8x768xbf16>
    %c3 = arith.constant 3 : index
    %c0_13 = arith.constant 0 : index
    %c0_14 = arith.constant 0 : index
    %20 = vector.load %arg3[%c3, %c0_13, %c0_14] : memref<9x32x8xbf16, #tpu.memory_space<vmem>>, vector<1x32x8xbf16>
    %21 = vector.shape_cast %20 : vector<1x32x8xbf16> to vector<32x8xbf16>
    %cst_15 = arith.constant dense<0.000000e+00> : vector<32x768xf32>
    %22 = tpu.matmul %21, %19, %cst_15 {dimension_numbers = #tpu.dot_dimension_numbers<[1], [0], [0], [1], [0, 0, 1, 1], [], []>} : vector<32x8xbf16>, vector<8x768xbf16>, vector<32x768xf32> -> vector<32x768xf32>
    %23 = arith.addf %18, %22 : vector<32x768xf32>
    %24 = vector.extract_strided_slice %2 {offsets = [0, 19], sizes = [8, 768], strides = [1, 1]} : vector<8x896xbf16> to vector<8x768xbf16>
    %c4 = arith.constant 4 : index
    %c0_16 = arith.constant 0 : index
    %c0_17 = arith.constant 0 : index
    %25 = vector.load %arg3[%c4, %c0_16, %c0_17] : memref<9x32x8xbf16, #tpu.memory_space<vmem>>, vector<1x32x8xbf16>
    %26 = vector.shape_cast %25 : vector<1x32x8xbf16> to vector<32x8xbf16>
    %cst_18 = arith.constant dense<0.000000e+00> : vector<32x768xf32>
    %27 = tpu.matmul %26, %24, %cst_18 {dimension_numbers = #tpu.dot_dimension_numbers<[1], [0], [0], [1], [0, 0, 1, 1], [], []>} : vector<32x8xbf16>, vector<8x768xbf16>, vector<32x768xf32> -> vector<32x768xf32>
    %28 = arith.addf %23, %27 : vector<32x768xf32>
    %29 = vector.extract_strided_slice %2 {offsets = [0, 20], sizes = [8, 768], strides = [1, 1]} : vector<8x896xbf16> to vector<8x768xbf16>
    %c5 = arith.constant 5 : index
    %c0_19 = arith.constant 0 : index
    %c0_20 = arith.constant 0 : index
    %30 = vector.load %arg3[%c5, %c0_19, %c0_20] : memref<9x32x8xbf16, #tpu.memory_space<vmem>>, vector<1x32x8xbf16>
    %31 = vector.shape_cast %30 : vector<1x32x8xbf16> to vector<32x8xbf16>
    %cst_21 = arith.constant dense<0.000000e+00> : vector<32x768xf32>
    %32 = tpu.matmul %31, %29, %cst_21 {dimension_numbers = #tpu.dot_dimension_numbers<[1], [0], [0], [1], [0, 0, 1, 1], [], []>} : vector<32x8xbf16>, vector<8x768xbf16>, vector<32x768xf32> -> vector<32x768xf32>
    %33 = arith.addf %28, %32 : vector<32x768xf32>
    %34 = vector.extract_strided_slice %2 {offsets = [0, 36], sizes = [8, 768], strides = [1, 1]} : vector<8x896xbf16> to vector<8x768xbf16>
    %c6 = arith.constant 6 : index
    %c0_22 = arith.constant 0 : index
    %c0_23 = arith.constant 0 : index
    %35 = vector.load %arg3[%c6, %c0_22, %c0_23] : memref<9x32x8xbf16, #tpu.memory_space<vmem>>, vector<1x32x8xbf16>
    %36 = vector.shape_cast %35 : vector<1x32x8xbf16> to vector<32x8xbf16>
    %cst_24 = arith.constant dense<0.000000e+00> : vector<32x768xf32>
    %37 = tpu.matmul %36, %34, %cst_24 {dimension_numbers = #tpu.dot_dimension_numbers<[1], [0], [0], [1], [0, 0, 1, 1], [], []>} : vector<32x8xbf16>, vector<8x768xbf16>, vector<32x768xf32> -> vector<32x768xf32>
    %38 = arith.addf %33, %37 : vector<32x768xf32>
    %39 = vector.extract_strided_slice %2 {offsets = [0, 37], sizes = [8, 768], strides = [1, 1]} : vector<8x896xbf16> to vector<8x768xbf16>
    %c7 = arith.constant 7 : index
    %c0_25 = arith.constant 0 : index
    %c0_26 = arith.constant 0 : index
    %40 = vector.load %arg3[%c7, %c0_25, %c0_26] : memref<9x32x8xbf16, #tpu.memory_space<vmem>>, vector<1x32x8xbf16>
    %41 = vector.shape_cast %40 : vector<1x32x8xbf16> to vector<32x8xbf16>
    %cst_27 = arith.constant dense<0.000000e+00> : vector<32x768xf32>
    %42 = tpu.matmul %41, %39, %cst_27 {dimension_numbers = #tpu.dot_dimension_numbers<[1], [0], [0], [1], [0, 0, 1, 1], [], []>} : vector<32x8xbf16>, vector<8x768xbf16>, vector<32x768xf32> -> vector<32x768xf32>
    %43 = arith.addf %38, %42 : vector<32x768xf32>
    %44 = vector.extract_strided_slice %2 {offsets = [0, 38], sizes = [8, 768], strides = [1, 1]} : vector<8x896xbf16> to vector<8x768xbf16>
    %c8 = arith.constant 8 : index
    %c0_28 = arith.constant 0 : index
    %c0_29 = arith.constant 0 : index
    %45 = vector.load %arg3[%c8, %c0_28, %c0_29] : memref<9x32x8xbf16, #tpu.memory_space<vmem>>, vector<1x32x8xbf16>
    %46 = vector.shape_cast %45 : vector<1x32x8xbf16> to vector<32x8xbf16>
    %cst_30 = arith.constant dense<0.000000e+00> : vector<32x768xf32>
    %47 = tpu.matmul %46, %44, %cst_30 {dimension_numbers = #tpu.dot_dimension_numbers<[1], [0], [0], [1], [0, 0, 1, 1], [], []>} : vector<32x8xbf16>, vector<8x768xbf16>, vector<32x768xf32> -> vector<32x768xf32>
    %48 = arith.addf %43, %47 : vector<32x768xf32>
    %c0_31 = arith.constant 0 : index
    %c0_32 = arith.constant 0 : index
    %49 = vector.load %arg4[%c0_31, %c0_32] : memref<32x1xf32, #tpu.memory_space<vmem>>, vector<32x1xf32>
    %50 = vector.broadcast %49 : vector<32x1xf32> to vector<32x768xf32>
    %51 = arith.addf %48, %50 : vector<32x768xf32>
    %cst_33 = arith.constant 5.000000e-01 : f32
    %52 = vector.broadcast %cst_33 : f32 to vector<32x768xf32>
    %53 = arith.mulf %52, %51 : vector<32x768xf32>
    %cst_34 = arith.constant 0.707106769 : f32
    %54 = vector.broadcast %cst_34 : f32 to vector<32x768xf32>
    %55 = arith.mulf %51, %54 : vector<32x768xf32>
    %56 = math.erf %55 : vector<32x768xf32>
    %cst_35 = arith.constant 1.000000e+00 : f32
    %57 = vector.broadcast %cst_35 : f32 to vector<32x768xf32>
    %58 = arith.addf %57, %56 : vector<32x768xf32>
    %59 = arith.mulf %53, %58 : vector<32x768xf32>
    %c0_36 = arith.constant 0 : index
    %c0_37 = arith.constant 0 : index
    %60 = vector.load %arg5[%c0_36, %c0_37] : memref<8x32xbf16, #tpu.memory_space<vmem>>, vector<8x32xbf16>
    %61 = arith.truncf %59 : vector<32x768xf32> to vector<32x768xbf16>
    %cst_38 = arith.constant dense<0.000000e+00> : vector<8x768xf32>
    %62 = tpu.matmul %60, %61, %cst_38 {dimension_numbers = #tpu.dot_dimension_numbers<[1], [0], [0], [1], [0, 0, 1, 1], [], []>} : vector<8x32xbf16>, vector<32x768xbf16>, vector<8x768xf32> -> vector<8x768xf32>
    %cst_39 = arith.constant 0.000000e+00 : f32
    %cst_40 = arith.constant 1.000000e+00 : f32
    %63 = vector.broadcast %cst_39 : f32 to vector<8x768xf32>
    %64 = arith.maximumf %63, %62 : vector<8x768xf32>
    %65 = vector.broadcast %cst_40 : f32 to vector<8x768xf32>
    %66 = arith.minimumf %65, %64 : vector<8x768xf32>
    %cst_41 = arith.constant 3.000000e+00 : f32
    %67 = vector.broadcast %cst_41 : f32 to vector<8x768xf32>
    %68 = arith.mulf %66, %67 : vector<8x768xf32>
    %69 = math.roundeven %68 : vector<8x768xf32>
    %cst_42 = arith.constant 0.333333343 : f32
    %70 = vector.broadcast %cst_42 : f32 to vector<8x768xf32>
    %71 = arith.mulf %69, %70 : vector<8x768xf32>
    %c0_43 = arith.constant 0 : index
    %c0_44 = arith.constant 0 : index
    %72 = vector.load %arg6[%c0_43, %c0_44] : memref<8x1xf32, #tpu.memory_space<vmem>>, vector<8x1xf32>
    %73 = vector.broadcast %72 : vector<8x1xf32> to vector<8x768xf32>
    %74 = arith.mulf %71, %73 : vector<8x768xf32>
    %c0_45 = arith.constant 0 : index
    %c0_46 = arith.constant 0 : index
    %75 = vector.load %arg7[%c0_45, %c0_46] : memref<8x1xf32, #tpu.memory_space<vmem>>, vector<8x1xf32>
    %76 = vector.broadcast %75 : vector<8x1xf32> to vector<8x768xf32>
    %77 = arith.addf %74, %76 : vector<8x768xf32>
    %c0_47 = arith.constant 0 : index
    %c0_48 = arith.constant 0 : index
    %78 = vector.load %arg8[%c0_47, %c0_48] : memref<8x768xf32, #tpu.memory_space<vmem>>, vector<8x768xf32>
    tpu.vector_store %arg8[%c0_47, %c0_48], %77 {strides = array<i32>} : memref<8x768xf32, #tpu.memory_space<vmem>>, vector<8x768xf32>,
    return
  }
  func.func @transform_0(%arg0: i32) -> (i32, i32) {
    %c0_i32 = arith.constant 0 : i32
    %c0_i32_0 = arith.constant 0 : i32
    return %c0_i32, %arg0 : i32, i32
  }
  func.func @transform_1(%arg0: i32) -> (i32, i32) {
    %c1_i32 = arith.constant 1 : i32
    %0 = arith.addi %arg0, %c1_i32 : i32
    %c6_i32 = arith.constant 6 : i32
    %1 = arith.muli %0, %c6_i32 : i32
    %c0_i32 = arith.constant 0 : i32
    %c0_i32_0 = arith.constant 0 : i32
    return %c0_i32, %1 : i32, i32
  }
  func.func @transform_2(%arg0: i32) -> (i32, i32, i32) {
    %c0_i32 = arith.constant 0 : i32
    %c0_i32_0 = arith.constant 0 : i32
    %c0_i32_1 = arith.constant 0 : i32
    %c0_i32_2 = arith.constant 0 : i32
    return %c0_i32, %c0_i32_0, %c0_i32_1 : i32, i32, i32
  }
  func.func @transform_3(%arg0: i32) -> (i32, i32) {
    %c0_i32 = arith.constant 0 : i32
    %c0_i32_0 = arith.constant 0 : i32
    %c0_i32_1 = arith.constant 0 : i32
    return %c0_i32, %c0_i32_0 : i32, i32
  }
  func.func @transform_4(%arg0: i32) -> (i32, i32) {
    %c0_i32 = arith.constant 0 : i32
    %c0_i32_0 = arith.constant 0 : i32
    %c0_i32_1 = arith.constant 0 : i32
    return %c0_i32, %c0_i32_0 : i32, i32
  }
  func.func @transform_5(%arg0: i32) -> (i32, i32) {
    %c0_i32 = arith.constant 0 : i32
    %c0_i32_0 = arith.constant 0 : i32
    %c0_i32_1 = arith.constant 0 : i32
    return %c0_i32, %c0_i32_0 : i32, i32
  }
  func.func @transform_6(%arg0: i32) -> (i32, i32) {
    %c0_i32 = arith.constant 0 : i32
    %c0_i32_0 = arith.constant 0 : i32
    %c0_i32_1 = arith.constant 0 : i32
    return %c0_i32, %c0_i32_0 : i32, i32
  }
  func.func @transform_7(%arg0: i32) -> (i32, i32) {
    %c0_i32 = arith.constant 0 : i32
    %c0_i32_0 = arith.constant 0 : i32
    return %c0_i32, %arg0 : i32, i32
  }
}

</mosaic_0001>

<llo_original>
// kernel: tpu_custom_call.1
$region0: #{tpu_custom_call.1}
  #allocation0 [shape = 'u32[]', space=smem, size = 0x4, offset = 0x4, fixed_abs, tag = 'smem constant byte address 0x4 - core index']
  #allocation1 [shape = 'u32[144,128]{1,0:T(1,128)}', space=vmem, size = 0x12000, scoped, tag = 'internal scratch']
  %s0 = inlined_call_operand.vmem [shape: bf16[8,896], index: 0, kind: input, shape index: {}]
  %s1 = inlined_call_operand.vmem [shape: bf16[8,896], index: 1, kind: input, shape index: {}]
  %s2 = inlined_call_operand.vmem [shape: bf16[9,32,8], index: 2, kind: input, shape index: {}]
  %s3 = inlined_call_operand.vmem [shape: f32[32,1], index: 3, kind: input, shape index: {}]
  %s4 = inlined_call_operand.vmem [shape: bf16[8,32], index: 4, kind: input, shape index: {}]
  %s5 = inlined_call_operand.vmem [shape: f32[8,1], index: 5, kind: input, shape index: {}]
  %s6 = inlined_call_operand.vmem [shape: f32[8,1], index: 6, kind: input, shape index: {}]
  %s7 = inlined_call_operand.hbm [shape: f32[8,768], index: 7, kind: output, shape index: {}]
  %s8 = sld [smem:[#allocation0]]
  $region38: #{tpu_custom_call.1} parent=0
    _
  %s10 = ssub.s32 1, %s8
  %s11 = scalar_select 0, %s10, %s8
  $region1: #{tpu_custom_call.1} parent=0
    #allocation2 [shape = 'u8[24576]{0}', space=vmem, size = 0x6000, scoped, tag = 'output window, operand 0, single buffered']
    #allocation3 [shape = 's32[1]{0}', space=sflag, size = 0x4, scoped, tag = 'scoped memory for tpu_custom_call.1']
    %12 = vsyncpa [#allocation3], 0
    // Predicated region
    $region2: #{tpu_custom_call.1} parent=1 // pred_check
      _
    $region3: #{tpu_custom_call.1} parent=1 // pred_check_branch
      %14 = sbr.rel (0) target = $region5
    $region4: #{tpu_custom_call.1} parent=1 // pred_region
      _
    $region5: #{tpu_custom_call.1} parent=1 // pred_fallthru
      _
    // Predicated region
    $region6: #{tpu_custom_call.1} parent=1 // pred_check
      _
    $region7: #{tpu_custom_call.1} parent=1 // pred_check_branch
      %16 = sbr.rel (0) target = $region9
    $region8: #{tpu_custom_call.1} parent=1 // pred_region
      %s17 = sadd.s32 0, 1
      %s18 = smul.u32 %s17, 6
      %p19 = scmp.lt.s32.totalorder %s18, 6
      %s20 = scalar_select %p19, %s18, 6
      %s21 = smul.addr %s20, 4
      %s22 = scalar_lea.vmem %s1, %s21
      %s23 = sadd.s32 0, 1
      %s24 = smul.u32 %s23, 6
    $region9: #{tpu_custom_call.1} parent=1 // pred_fallthru
      _
    // Predicated region
    $region10: #{tpu_custom_call.1} parent=1 // pred_check
      _
    $region11: #{tpu_custom_call.1} parent=1 // pred_check_branch
      %26 = sbr.rel (0) target = $region13
    $region12: #{tpu_custom_call.1} parent=1 // pred_region
      _
    $region13: #{tpu_custom_call.1} parent=1 // pred_fallthru
      _
    // Predicated region
    $region14: #{tpu_custom_call.1} parent=1 // pred_check
      _
    $region15: #{tpu_custom_call.1} parent=1 // pred_check_branch
      %28 = sbr.rel (0) target = $region17
    $region16: #{tpu_custom_call.1} parent=1 // pred_region
      _
    $region17: #{tpu_custom_call.1} parent=1 // pred_fallthru
      _
    // Predicated region
    $region18: #{tpu_custom_call.1} parent=1 // pred_check
      _
    $region19: #{tpu_custom_call.1} parent=1 // pred_check_branch
      %30 = sbr.rel (0) target = $region21
    $region20: #{tpu_custom_call.1} parent=1 // pred_region
      _
    $region21: #{tpu_custom_call.1} parent=1 // pred_fallthru
      _
    // Predicated region
    $region22: #{tpu_custom_call.1} parent=1 // pred_check
      _
    $region23: #{tpu_custom_call.1} parent=1 // pred_check_branch
      %32 = sbr.rel (0) target = $region25
    $region24: #{tpu_custom_call.1} parent=1 // pred_region
      _
    $region25: #{tpu_custom_call.1} parent=1 // pred_fallthru
      _
    // Predicated region
    $region26: #{tpu_custom_call.1} parent=1 // pred_check
      _
    $region27: #{tpu_custom_call.1} parent=1 // pred_check_branch
      %34 = sbr.rel (0) target = $region29
    $region28: #{tpu_custom_call.1} parent=1 // pred_region
      _
    $region29: #{tpu_custom_call.1} parent=1 // pred_fallthru
      _
    %s35 = sadd.s32 0, 1
    %s36 = smul.u32 %s35, 6
    %p37 = scmp.lt.s32.totalorder %s36, 6
    %s38 = scalar_select %p37, %s36, 6
    %s39 = smul.addr %s38, 4
    %s40 = scalar_lea.vmem %s1, %s39
    %s41 = sadd.s32 0, 1
    %s42 = smul.u32 %s41, 6
    %p43 = scmp.lt.s32.totalorder %s42, 6
    %s44 = scalar_select %p43, %s42, 6
    %s45 = smul.addr %s44, 4
    %s46 = scalar_lea.vmem %s1, %s45
    %s47 = sadd.s32 0, 1
    %s48 = smul.u32 %s47, 6
    %v50 = vld [vmem:[%s0] sm:$0xff]
    %v51 = vld [vmem:[%s0 + $0x8] sm:$0xff]
    %v52 = vld [vmem:[%s0 + $0x10] sm:$0xff]
    %v53 = vld [vmem:[%s46] sm:$0xf]
    %v57 = vunpack.c.l.b16 %v50
    %v58 = vunpack.c.h.b16 %v50
    %v59 = vunpack.c.l.b16 %v51
    %v60 = vunpack.c.h.b16 %v51
    %v61 = vunpack.c.l.b16 %v52
    %v62 = vunpack.c.h.b16 %v52
    %v63 = vpack.c.b16 %v57, %v57
    %v64 = vpack.c.b16 %v58, %v58
    %v65 = vpack.c.b16 %v59, %v59
    %v66 = vpack.c.b16 %v60, %v60
    %v67 = vpack.c.b16 %v61, %v61
    %v68 = vpack.c.b16 %v62, %v62
    %v69 = vld [vmem:[%s2] sm:$0xf]
    %v70 = vld [vmem:[%s2 + $0x4] sm:$0xf]
    %v71 = vld [vmem:[%s2 + $0x8] sm:$0xf]
    %v72 = vld [vmem:[%s2 + $0xc] sm:$0xf]
    %s73 = scalar_lea.vmem %s2, 16
    %v74 = vld [vmem:[%s73] sm:$0xf]
    %v75 = vld [vmem:[%s73 + $0x4] sm:$0xf]
    %v76 = vld [vmem:[%s73 + $0x8] sm:$0xf]
    %v77 = vld [vmem:[%s73 + $0xc] sm:$0xf]
    %v82 = vunpack.c.l.b16 %v74
    %v83 = vunpack.c.l.b16 %v75
    %v84 = vunpack.c.l.b16 %v76
    %v85 = vunpack.c.l.b16 %v77
    %v86 = vpack.c.b16 %v83, %v82
    %v87 = vpack.c.b16 %v85, %v84
    %89 = vrot.lane.b32.xlu0 %v63, 127
    %v90 = vpop.permute.xlu0 %89
    %91 = vrot.lane.b32.xlu0 %v64, 127
    %v92 = vpop.permute.xlu0 %91
    %93 = vrot.lane.b32.xlu0 %v65, 127
    %v94 = vpop.permute.xlu0 %93
    %95 = vrot.lane.b32.xlu0 %v66, 127
    %v96 = vpop.permute.xlu0 %95
    %97 = vrot.lane.b32.xlu0 %v67, 127
    %v98 = vpop.permute.xlu0 %97
    %99 = vrot.lane.b32.xlu0 %v68, 127
    %v100 = vpop.permute.xlu0 %99
    %101 = vrot.lane.b32.xlu0 %v53, 127
    %v102 = vpop.permute.xlu0 %101
    %vm103 = vcmask 1039360
    %v104 = vsel %vm103, %v90, %v92
    %v105 = vsel %vm103, %v92, %v94
    %v106 = vsel %vm103, %v94, %v96
    %v107 = vsel %vm103, %v96, %v98
    %v108 = vsel %vm103, %v98, %v100
    %v109 = vsel %vm103, %v100, %v102
    %vm110 = vcmask 64512
    %v112 = vsel %vm110, %v86, 0
    %v115 = vsel %vm110, %v87, 0
    %vm117 = vcmask 1043456
    %v119 = vsel %vm117, %v104, 0
    %v122 = vsel %vm117, %v105, 0
    %v125 = vsel %vm117, %v106, 0
    %v128 = vsel %vm117, %v107, 0
    %v131 = vsel %vm117, %v108, 0
    %v134 = vsel %vm117, %v109, 0
    %136 = vmatprep.subr.bf16.mxu0 %v122
    %137 = vmatpush1.bf16.msra.mxu0 %v119
    %138 = vmatprep.subr.bf16.mxu0 0
    %139 = vmatpush1.bf16.msra.mxu0 0
    %140 = vmatprep.subr.bf16.mxu0 0
    %141 = vmatpush1.bf16.msra.mxu0 0
    %142 = vmatprep.subr.bf16.mxu0 0
    %143 = vmatpush1.bf16.msra.mxu0 0
    %144 = vmatprep.subr.bf16.mxu0 0
    %145 = vmatpush1.bf16.msra.mxu0 0
    %146 = vmatprep.subr.bf16.mxu0 0
    %147 = vmatpush1.bf16.msra.mxu0 0
    %148 = vmatprep.subr.bf16.mxu0 0
    %149 = vmatpush1.bf16.msra.mxu0 0
    %150 = vmatprep.subr.bf16.mxu0 0
    %151 = vmatpush1.bf16.msra.mxu0 0
    %152 = vmatprep.subr.bf16.mxu0 0
    %153 = vmatpush1.bf16.msra.mxu0 0
    %154 = vmatprep.subr.bf16.mxu0 0
    %155 = vmatpush1.bf16.msra.mxu0 0
    %156 = vmatprep.subr.bf16.mxu0 0
    %157 = vmatpush1.bf16.msra.mxu0 0
    %158 = vmatprep.subr.bf16.mxu0 0
    %159 = vmatpush1.bf16.msra.mxu0 0
    %160 = vmatprep.subr.bf16.mxu0 0
    %161 = vmatpush1.bf16.msra.mxu0 0
    %162 = vmatprep.subr.bf16.mxu0 0
    %163 = vmatpush1.bf16.msra.mxu0 0
    %164 = vmatprep.subr.bf16.mxu0 0
    %165 = vmatpush1.bf16.msra.mxu0 0
    %166 = vmatprep.subr.bf16.mxu0 0
    %167 = vmatpush1.bf16.msra.mxu0 0
    %168 = vmatprep.mubr.bf16.mxu0 0
    %169 = vmatmul.mubr.bf16.gmra.mrb[0].mxu0 %v112
    %v170 = vpop.f32.mrb[0].mxu0
    %v171 = vadd.f32 0.0, %v170
    %v172 = vpop.f32.mrb[0].mxu0
    %v173 = vadd.f32 0.0, %v172
    %v174 = vpop.f32.mrb[0].mxu0
    %v175 = vadd.f32 0.0, %v174
    %v176 = vpop.f32.mrb[0].mxu0
    %v177 = vadd.f32 0.0, %v176
    %178 = vmatprep.mubr.bf16.mxu0 0
    %179 = vmatmul.mubr.bf16.gmra.mrb[0].mxu0 %v115
    %v180 = vpop.f32.mrb[0].mxu0
    %v181 = vadd.f32 0.0, %v180
    %v182 = vpop.f32.mrb[0].mxu0
    %v183 = vadd.f32 0.0, %v182
    %v184 = vpop.f32.mrb[0].mxu0
    %v185 = vadd.f32 0.0, %v184
    %v186 = vpop.f32.mrb[0].mxu0
    %v187 = vadd.f32 0.0, %v186
    %188 = vdwg.mxu0
    %189 = vmatprep.subr.bf16.mxu0 %v128
    %190 = vmatpush1.bf16.msra.mxu0 %v125
    %191 = vmatprep.subr.bf16.mxu0 0
    %192 = vmatpush1.bf16.msra.mxu0 0
    %193 = vmatprep.subr.bf16.mxu0 0
    %194 = vmatpush1.bf16.msra.mxu0 0
    %195 = vmatprep.subr.bf16.mxu0 0
    %196 = vmatpush1.bf16.msra.mxu0 0
    %197 = vmatprep.subr.bf16.mxu0 0
    %198 = vmatpush1.bf16.msra.mxu0 0
    %199 = vmatprep.subr.bf16.mxu0 0
    %200 = vmatpush1.bf16.msra.mxu0 0
    %201 = vmatprep.subr.bf16.mxu0 0
    %202 = vmatpush1.bf16.msra.mxu0 0
    %203 = vmatprep.subr.bf16.mxu0 0
    %204 = vmatpush1.bf16.msra.mxu0 0
    %205 = vmatprep.subr.bf16.mxu0 0
    %206 = vmatpush1.bf16.msra.mxu0 0
    %207 = vmatprep.subr.bf16.mxu0 0
    %208 = vmatpush1.bf16.msra.mxu0 0
    %209 = vmatprep.subr.bf16.mxu0 0
    %210 = vmatpush1.bf16.msra.mxu0 0
    %211 = vmatprep.subr.bf16.mxu0 0
    %212 = vmatpush1.bf16.msra.mxu0 0
    %213 = vmatprep.subr.bf16.mxu0 0
    %214 = vmatpush1.bf16.msra.mxu0 0
    %215 = vmatprep.subr.bf16.mxu0 0
    %216 = vmatpush1.bf16.msra.mxu0 0
    %217 = vmatprep.subr.bf16.mxu0 0
    %218 = vmatpush1.bf16.msra.mxu0 0
    %219 = vmatprep.subr.bf16.mxu0 0
    %220 = vmatpush1.bf16.msra.mxu0 0
    %221 = vmatprep.mubr.bf16.mxu0 0
    %222 = vmatmul.mubr.bf16.gmra.mrb[0].mxu0 %v112
    %v223 = vpop.f32.mrb[0].mxu0
    %v224 = vadd.f32 0.0, %v223
    %v225 = vpop.f32.mrb[0].mxu0
    %v226 = vadd.f32 0.0, %v225
    %v227 = vpop.f32.mrb[0].mxu0
    %v228 = vadd.f32 0.0, %v227
    %v229 = vpop.f32.mrb[0].mxu0
    %v230 = vadd.f32 0.0, %v229
    %231 = vmatprep.mubr.bf16.mxu0 0
    %232 = vmatmul.mubr.bf16.gmra.mrb[0].mxu0 %v115
    %v233 = vpop.f32.mrb[0].mxu0
    %v234 = vadd.f32 0.0, %v233
    %v235 = vpop.f32.mrb[0].mxu0
    %v236 = vadd.f32 0.0, %v235
    %v237 = vpop.f32.mrb[0].mxu0
    %v238 = vadd.f32 0.0, %v237
    %v239 = vpop.f32.mrb[0].mxu0
    %v240 = vadd.f32 0.0, %v239
    %241 = vdwg.mxu0
    %242 = vmatprep.subr.bf16.mxu0 %v134
    %243 = vmatpush1.bf16.msra.mxu0 %v131
    %244 = vmatprep.subr.bf16.mxu0 0
    %245 = vmatpush1.bf16.msra.mxu0 0
    %246 = vmatprep.subr.bf16.mxu0 0
    %247 = vmatpush1.bf16.msra.mxu0 0
    %248 = vmatprep.subr.bf16.mxu0 0
    %249 = vmatpush1.bf16.msra.mxu0 0
    %250 = vmatprep.subr.bf16.mxu0 0
    %251 = vmatpush1.bf16.msra.mxu0 0
    %252 = vmatprep.subr.bf16.mxu0 0
    %253 = vmatpush1.bf16.msra.mxu0 0
    %254 = vmatprep.subr.bf16.mxu0 0
    %255 = vmatpush1.bf16.msra.mxu0 0
    %256 = vmatprep.subr.bf16.mxu0 0
    %257 = vmatpush1.bf16.msra.mxu0 0
    %258 = vmatprep.subr.bf16.mxu0 0
    %259 = vmatpush1.bf16.msra.mxu0 0
    %260 = vmatprep.subr.bf16.mxu0 0
    %261 = vmatpush1.bf16.msra.mxu0 0
    %262 = vmatprep.subr.bf16.mxu0 0
    %263 = vmatpush1.bf16.msra.mxu0 0
    %264 = vmatprep.subr.bf16.mxu0 0
    %265 = vmatpush1.bf16.msra.mxu0 0
    %266 = vmatprep.subr.bf16.mxu0 0
    %267 = vmatpush1.bf16.msra.mxu0 0
    %268 = vmatprep.subr.bf16.mxu0 0
    %269 = vmatpush1.bf16.msra.mxu0 0
    %270 = vmatprep.subr.bf16.mxu0 0
    %271 = vmatpush1.bf16.msra.mxu0 0
    %272 = vmatprep.subr.bf16.mxu0 0
    %273 = vmatpush1.bf16.msra.mxu0 0
    %274 = vmatprep.mubr.bf16.mxu0 0
    %275 = vmatmul.mubr.bf16.gmra.mrb[0].mxu0 %v112
    %v276 = vpop.f32.mrb[0].mxu0
    %v277 = vadd.f32 0.0, %v276
    %v278 = vpop.f32.mrb[0].mxu0
    %v279 = vadd.f32 0.0, %v278
    %v280 = vpop.f32.mrb[0].mxu0
    %v281 = vadd.f32 0.0, %v280
    %v282 = vpop.f32.mrb[0].mxu0
    %v283 = vadd.f32 0.0, %v282
    %284 = vmatprep.mubr.bf16.mxu0 0
    %285 = vmatmul.mubr.bf16.gmra.mrb[0].mxu0 %v115
    %v286 = vpop.f32.mrb[0].mxu0
    %v287 = vadd.f32 0.0, %v286
    %v288 = vpop.f32.mrb[0].mxu0
    %v289 = vadd.f32 0.0, %v288
    %v290 = vpop.f32.mrb[0].mxu0
    %v291 = vadd.f32 0.0, %v290
    %v292 = vpop.f32.mrb[0].mxu0
    %v293 = vadd.f32 0.0, %v292
    %294 = vdwg.mxu0
    %v299 = vunpack.c.l.b16 %v69
    %v300 = vunpack.c.l.b16 %v70
    %v301 = vunpack.c.l.b16 %v71
    %v302 = vunpack.c.l.b16 %v72
    %v303 = vpack.c.b16 %v300, %v299
    %v304 = vpack.c.b16 %v302, %v301
    %v306 = vsel %vm110, %v303, 0
    %v309 = vsel %vm110, %v304, 0
    %v312 = vsel %vm117, %v63, 0
    %v315 = vsel %vm117, %v64, 0
    %v318 = vsel %vm117, %v65, 0
    %v321 = vsel %vm117, %v66, 0
    %v324 = vsel %vm117, %v67, 0
    %v327 = vsel %vm117, %v68, 0
    %329 = vmatprep.subr.bf16.mxu0 %v315
    %330 = vmatpush1.bf16.msra.mxu0 %v312
    %331 = vmatprep.subr.bf16.mxu0 0
    %332 = vmatpush1.bf16.msra.mxu0 0
    %333 = vmatprep.subr.bf16.mxu0 0
    %334 = vmatpush1.bf16.msra.mxu0 0
    %335 = vmatprep.subr.bf16.mxu0 0
    %336 = vmatpush1.bf16.msra.mxu0 0
    %337 = vmatprep.subr.bf16.mxu0 0
    %338 = vmatpush1.bf16.msra.mxu0 0
    %339 = vmatprep.subr.bf16.mxu0 0
    %340 = vmatpush1.bf16.msra.mxu0 0
    %341 = vmatprep.subr.bf16.mxu0 0
    %342 = vmatpush1.bf16.msra.mxu0 0
    %343 = vmatprep.subr.bf16.mxu0 0
    %344 = vmatpush1.bf16.msra.mxu0 0
    %345 = vmatprep.subr.bf16.mxu0 0
    %346 = vmatpush1.bf16.msra.mxu0 0
    %347 = vmatprep.subr.bf16.mxu0 0
    %348 = vmatpush1.bf16.msra.mxu0 0
    %349 = vmatprep.subr.bf16.mxu0 0
    %350 = vmatpush1.bf16.msra.mxu0 0
    %351 = vmatprep.subr.bf16.mxu0 0
    %352 = vmatpush1.bf16.msra.mxu0 0
    %353 = vmatprep.subr.bf16.mxu0 0
    %354 = vmatpush1.bf16.msra.mxu0 0
    %355 = vmatprep.subr.bf16.mxu0 0
    %356 = vmatpush1.bf16.msra.mxu0 0
    %357 = vmatprep.subr.bf16.mxu0 0
    %358 = vmatpush1.bf16.msra.mxu0 0
    %359 = vmatprep.subr.bf16.mxu0 0
    %360 = vmatpush1.bf16.msra.mxu0 0
    %361 = vmatprep.mubr.bf16.mxu0 0
    %362 = vmatmul.mubr.bf16.gmra.mrb[0].mxu0 %v306
    %v363 = vpop.f32.mrb[0].mxu0
    %v364 = vadd.f32 %v171, %v363
    %v365 = vpop.f32.mrb[0].mxu0
    %v366 = vadd.f32 %v173, %v365
    %v367 = vpop.f32.mrb[0].mxu0
    %v368 = vadd.f32 %v175, %v367
    %v369 = vpop.f32.mrb[0].mxu0
    %v370 = vadd.f32 %v177, %v369
    %371 = vmatprep.mubr.bf16.mxu0 0
    %372 = vmatmul.mubr.bf16.gmra.mrb[0].mxu0 %v309
    %v373 = vpop.f32.mrb[0].mxu0
    %v374 = vadd.f32 %v181, %v373
    %v375 = vpop.f32.mrb[0].mxu0
    %v376 = vadd.f32 %v183, %v375
    %v377 = vpop.f32.mrb[0].mxu0
    %v378 = vadd.f32 %v185, %v377
    %v379 = vpop.f32.mrb[0].mxu0
    %v380 = vadd.f32 %v187, %v379
    %381 = vdwg.mxu0
    %382 = vmatprep.subr.bf16.mxu0 %v321
    %383 = vmatpush1.bf16.msra.mxu0 %v318
    %384 = vmatprep.subr.bf16.mxu0 0
    %385 = vmatpush1.bf16.msra.mxu0 0
    %386 = vmatprep.subr.bf16.mxu0 0
    %387 = vmatpush1.bf16.msra.mxu0 0
    %388 = vmatprep.subr.bf16.mxu0 0
    %389 = vmatpush1.bf16.msra.mxu0 0
    %390 = vmatprep.subr.bf16.mxu0 0
    %391 = vmatpush1.bf16.msra.mxu0 0
    %392 = vmatprep.subr.bf16.mxu0 0
    %393 = vmatpush1.bf16.msra.mxu0 0
    %394 = vmatprep.subr.bf16.mxu0 0
    %395 = vmatpush1.bf16.msra.mxu0 0
    %396 = vmatprep.subr.bf16.mxu0 0
    %397 = vmatpush1.bf16.msra.mxu0 0
    %398 = vmatprep.subr.bf16.mxu0 0
    %399 = vmatpush1.bf16.msra.mxu0 0
    %400 = vmatprep.subr.bf16.mxu0 0
    %401 = vmatpush1.bf16.msra.mxu0 0
    %402 = vmatprep.subr.bf16.mxu0 0
    %403 = vmatpush1.bf16.msra.mxu0 0
    %404 = vmatprep.subr.bf16.mxu0 0
    %405 = vmatpush1.bf16.msra.mxu0 0
    %406 = vmatprep.subr.bf16.mxu0 0
    %407 = vmatpush1.bf16.msra.mxu0 0
    %408 = vmatprep.subr.bf16.mxu0 0
    %409 = vmatpush1.bf16.msra.mxu0 0
    %410 = vmatprep.subr.bf16.mxu0 0
    %411 = vmatpush1.bf16.msra.mxu0 0
    %412 = vmatprep.subr.bf16.mxu0 0
    %413 = vmatpush1.bf16.msra.mxu0 0
    %414 = vmatprep.mubr.bf16.mxu0 0
    %415 = vmatmul.mubr.bf16.gmra.mrb[0].mxu0 %v306
    %v416 = vpop.f32.mrb[0].mxu0
    %v417 = vadd.f32 %v224, %v416
    %v418 = vpop.f32.mrb[0].mxu0
    %v419 = vadd.f32 %v226, %v418
    %v420 = vpop.f32.mrb[0].mxu0
    %v421 = vadd.f32 %v228, %v420
    %v422 = vpop.f32.mrb[0].mxu0
    %v423 = vadd.f32 %v230, %v422
    %424 = vmatprep.mubr.bf16.mxu0 0
    %425 = vmatmul.mubr.bf16.gmra.mrb[0].mxu0 %v309
    %v426 = vpop.f32.mrb[0].mxu0
    %v427 = vadd.f32 %v234, %v426
    %v428 = vpop.f32.mrb[0].mxu0
    %v429 = vadd.f32 %v236, %v428
    %v430 = vpop.f32.mrb[0].mxu0
    %v431 = vadd.f32 %v238, %v430
    %v432 = vpop.f32.mrb[0].mxu0
    %v433 = vadd.f32 %v240, %v432
    %434 = vdwg.mxu0
    %435 = vmatprep.subr.bf16.mxu0 %v327
    %436 = vmatpush1.bf16.msra.mxu0 %v324
    %437 = vmatprep.subr.bf16.mxu0 0
    %438 = vmatpush1.bf16.msra.mxu0 0
    %439 = vmatprep.subr.bf16.mxu0 0
    %440 = vmatpush1.bf16.msra.mxu0 0
    %441 = vmatprep.subr.bf16.mxu0 0
    %442 = vmatpush1.bf16.msra.mxu0 0
    %443 = vmatprep.subr.bf16.mxu0 0
    %444 = vmatpush1.bf16.msra.mxu0 0
    %445 = vmatprep.subr.bf16.mxu0 0
    %446 = vmatpush1.bf16.msra.mxu0 0
    %447 = vmatprep.subr.bf16.mxu0 0
    %448 = vmatpush1.bf16.msra.mxu0 0
    %449 = vmatprep.subr.bf16.mxu0 0
    %450 = vmatpush1.bf16.msra.mxu0 0
    %451 = vmatprep.subr.bf16.mxu0 0
    %452 = vmatpush1.bf16.msra.mxu0 0
    %453 = vmatprep.subr.bf16.mxu0 0
    %454 = vmatpush1.bf16.msra.mxu0 0
    %455 = vmatprep.subr.bf16.mxu0 0
    %456 = vmatpush1.bf16.msra.mxu0 0
    %457 = vmatprep.subr.bf16.mxu0 0
    %458 = vmatpush1.bf16.msra.mxu0 0
    %459 = vmatprep.subr.bf16.mxu0 0
    %460 = vmatpush1.bf16.msra.mxu0 0
    %461 = vmatprep.subr.bf16.mxu0 0
    %462 = vmatpush1.bf16.msra.mxu0 0
    %463 = vmatprep.subr.bf16.mxu0 0
    %464 = vmatpush1.bf16.msra.mxu0 0
    %465 = vmatprep.subr.bf16.mxu0 0
    %466 = vmatpush1.bf16.msra.mxu0 0
    %467 = vmatprep.mubr.bf16.mxu0 0
    %468 = vmatmul.mubr.bf16.gmra.mrb[0].mxu0 %v306
    %v469 = vpop.f32.mrb[0].mxu0
    %v470 = vadd.f32 %v277, %v469
    %v471 = vpop.f32.mrb[0].mxu0
    %v472 = vadd.f32 %v279, %v471
    %v473 = vpop.f32.mrb[0].mxu0
    %v474 = vadd.f32 %v281, %v473
    %v475 = vpop.f32.mrb[0].mxu0
    %v476 = vadd.f32 %v283, %v475
    %477 = vmatprep.mubr.bf16.mxu0 0
    %478 = vmatmul.mubr.bf16.gmra.mrb[0].mxu0 %v309
    %v479 = vpop.f32.mrb[0].mxu0
    %v480 = vadd.f32 %v287, %v479
    %v481 = vpop.f32.mrb[0].mxu0
    %v482 = vadd.f32 %v289, %v481
    %v483 = vpop.f32.mrb[0].mxu0
    %v484 = vadd.f32 %v291, %v483
    %v485 = vpop.f32.mrb[0].mxu0
    %v486 = vadd.f32 %v293, %v485
    %487 = vdwg.mxu0
    %s488 = scalar_lea.vmem %s2, 32
    %v489 = vld [vmem:[%s488] sm:$0xf]
    %v490 = vld [vmem:[%s488 + $0x4] sm:$0xf]
    %v491 = vld [vmem:[%s488 + $0x8] sm:$0xf]
    %v492 = vld [vmem:[%s488 + $0xc] sm:$0xf]
    %v497 = vunpack.c.l.b16 %v489
    %v498 = vunpack.c.l.b16 %v490
    %v499 = vunpack.c.l.b16 %v491
    %v500 = vunpack.c.l.b16 %v492
    %v501 = vpack.c.b16 %v498, %v497
    %v502 = vpack.c.b16 %v500, %v499
    %503 = vrot.lane.b32.xlu0 %v63, 126
    %v504 = vpop.permute.xlu0 %503
    %505 = vrot.lane.b32.xlu0 %v64, 126
    %v506 = vpop.permute.xlu0 %505
    %507 = vrot.lane.b32.xlu0 %v65, 126
    %v508 = vpop.permute.xlu0 %507
    %509 = vrot.lane.b32.xlu0 %v66, 126
    %v510 = vpop.permute.xlu0 %509
    %511 = vrot.lane.b32.xlu0 %v67, 126
    %v512 = vpop.permute.xlu0 %511
    %513 = vrot.lane.b32.xlu0 %v68, 126
    %v514 = vpop.permute.xlu0 %513
    %515 = vrot.lane.b32.xlu0 %v53, 126
    %v516 = vpop.permute.xlu0 %515
    %vm517 = vcmask 1031168
    %v518 = vsel %vm517, %v504, %v506
    %v519 = vsel %vm517, %v506, %v508
    %v520 = vsel %vm517, %v508, %v510
    %v521 = vsel %vm517, %v510, %v512
    %v522 = vsel %vm517, %v512, %v514
    %v523 = vsel %vm517, %v514, %v516
    %v525 = vsel %vm110, %v501, 0
    %v528 = vsel %vm110, %v502, 0
    %v531 = vsel %vm117, %v518, 0
    %v534 = vsel %vm117, %v519, 0
    %v537 = vsel %vm117, %v520, 0
    %v540 = vsel %vm117, %v521, 0
    %v543 = vsel %vm117, %v522, 0
    %v546 = vsel %vm117, %v523, 0
    %548 = vmatprep.subr.bf16.mxu0 %v534
    %549 = vmatpush1.bf16.msra.mxu0 %v531
    %550 = vmatprep.subr.bf16.mxu0 0
    %551 = vmatpush1.bf16.msra.mxu0 0
    %552 = vmatprep.subr.bf16.mxu0 0
    %553 = vmatpush1.bf16.msra.mxu0 0
    %554 = vmatprep.subr.bf16.mxu0 0
    %555 = vmatpush1.bf16.msra.mxu0 0
    %556 = vmatprep.subr.bf16.mxu0 0
    %557 = vmatpush1.bf16.msra.mxu0 0
    %558 = vmatprep.subr.bf16.mxu0 0
    %559 = vmatpush1.bf16.msra.mxu0 0
    %560 = vmatprep.subr.bf16.mxu0 0
    %561 = vmatpush1.bf16.msra.mxu0 0
    %562 = vmatprep.subr.bf16.mxu0 0
    %563 = vmatpush1.bf16.msra.mxu0 0
    %564 = vmatprep.subr.bf16.mxu0 0
    %565 = vmatpush1.bf16.msra.mxu0 0
    %566 = vmatprep.subr.bf16.mxu0 0
    %567 = vmatpush1.bf16.msra.mxu0 0
    %568 = vmatprep.subr.bf16.mxu0 0
    %569 = vmatpush1.bf16.msra.mxu0 0
    %570 = vmatprep.subr.bf16.mxu0 0
    %571 = vmatpush1.bf16.msra.mxu0 0
    %572 = vmatprep.subr.bf16.mxu0 0
    %573 = vmatpush1.bf16.msra.mxu0 0
    %574 = vmatprep.subr.bf16.mxu0 0
    %575 = vmatpush1.bf16.msra.mxu0 0
    %576 = vmatprep.subr.bf16.mxu0 0
    %577 = vmatpush1.bf16.msra.mxu0 0
    %578 = vmatprep.subr.bf16.mxu0 0
    %579 = vmatpush1.bf16.msra.mxu0 0
    %580 = vmatprep.mubr.bf16.mxu0 0
    %581 = vmatmul.mubr.bf16.gmra.mrb[0].mxu0 %v525
    %v582 = vpop.f32.mrb[0].mxu0
    %v583 = vadd.f32 0.0, %v582
    %v584 = vpop.f32.mrb[0].mxu0
    %v585 = vadd.f32 0.0, %v584
    %v586 = vpop.f32.mrb[0].mxu0
    %v587 = vadd.f32 0.0, %v586
    %v588 = vpop.f32.mrb[0].mxu0
    %v589 = vadd.f32 0.0, %v588
    %590 = vmatprep.mubr.bf16.mxu0 0
    %591 = vmatmul.mubr.bf16.gmra.mrb[0].mxu0 %v528
    %v592 = vpop.f32.mrb[0].mxu0
    %v593 = vadd.f32 0.0, %v592
    %v594 = vpop.f32.mrb[0].mxu0
    %v595 = vadd.f32 0.0, %v594
    %v596 = vpop.f32.mrb[0].mxu0
    %v597 = vadd.f32 0.0, %v596
    %v598 = vpop.f32.mrb[0].mxu0
    %v599 = vadd.f32 0.0, %v598
    %600 = vdwg.mxu0
    %601 = vmatprep.subr.bf16.mxu0 %v540
    %602 = vmatpush1.bf16.msra.mxu0 %v537
    %603 = vmatprep.subr.bf16.mxu0 0
    %604 = vmatpush1.bf16.msra.mxu0 0
    %605 = vmatprep.subr.bf16.mxu0 0
    %606 = vmatpush1.bf16.msra.mxu0 0
    %607 = vmatprep.subr.bf16.mxu0 0
    %608 = vmatpush1.bf16.msra.mxu0 0
    %609 = vmatprep.subr.bf16.mxu0 0
    %610 = vmatpush1.bf16.msra.mxu0 0
    %611 = vmatprep.subr.bf16.mxu0 0
    %612 = vmatpush1.bf16.msra.mxu0 0
    %613 = vmatprep.subr.bf16.mxu0 0
    %614 = vmatpush1.bf16.msra.mxu0 0
    %615 = vmatprep.subr.bf16.mxu0 0
    %616 = vmatpush1.bf16.msra.mxu0 0
    %617 = vmatprep.subr.bf16.mxu0 0
    %618 = vmatpush1.bf16.msra.mxu0 0
    %619 = vmatprep.subr.bf16.mxu0 0
    %620 = vmatpush1.bf16.msra.mxu0 0
    %621 = vmatprep.subr.bf16.mxu0 0
    %622 = vmatpush1.bf16.msra.mxu0 0
    %623 = vmatprep.subr.bf16.mxu0 0
    %624 = vmatpush1.bf16.msra.mxu0 0
    %625 = vmatprep.subr.bf16.mxu0 0
    %626 = vmatpush1.bf16.msra.mxu0 0
    %627 = vmatprep.subr.bf16.mxu0 0
    %628 = vmatpush1.bf16.msra.mxu0 0
    %629 = vmatprep.subr.bf16.mxu0 0
    %630 = vmatpush1.bf16.msra.mxu0 0
    %631 = vmatprep.subr.bf16.mxu0 0
    %632 = vmatpush1.bf16.msra.mxu0 0
    %633 = vmatprep.mubr.bf16.mxu0 0
    %634 = vmatmul.mubr.bf16.gmra.mrb[0].mxu0 %v525
    %v635 = vpop.f32.mrb[0].mxu0
    %v636 = vadd.f32 0.0, %v635
    %v637 = vpop.f32.mrb[0].mxu0
    %v638 = vadd.f32 0.0, %v637
    %v639 = vpop.f32.mrb[0].mxu0
    %v640 = vadd.f32 0.0, %v639
    %v641 = vpop.f32.mrb[0].mxu0
    %v642 = vadd.f32 0.0, %v641
    %643 = vmatprep.mubr.bf16.mxu0 0
    %644 = vmatmul.mubr.bf16.gmra.mrb[0].mxu0 %v528
    %v645 = vpop.f32.mrb[0].mxu0
    %v646 = vadd.f32 0.0, %v645
    %v647 = vpop.f32.mrb[0].mxu0
    %v648 = vadd.f32 0.0, %v647
    %v649 = vpop.f32.mrb[0].mxu0
    %v650 = vadd.f32 0.0, %v649
    %v651 = vpop.f32.mrb[0].mxu0
    %v652 = vadd.f32 0.0, %v651
    %653 = vdwg.mxu0
    %654 = vmatprep.subr.bf16.mxu0 %v546
    %655 = vmatpush1.bf16.msra.mxu0 %v543
    %656 = vmatprep.subr.bf16.mxu0 0
    %657 = vmatpush1.bf16.msra.mxu0 0
    %658 = vmatprep.subr.bf16.mxu0 0
    %659 = vmatpush1.bf16.msra.mxu0 0
    %660 = vmatprep.subr.bf16.mxu0 0
    %661 = vmatpush1.bf16.msra.mxu0 0
    %662 = vmatprep.subr.bf16.mxu0 0
    %663 = vmatpush1.bf16.msra.mxu0 0
    %664 = vmatprep.subr.bf16.mxu0 0
    %665 = vmatpush1.bf16.msra.mxu0 0
    %666 = vmatprep.subr.bf16.mxu0 0
    %667 = vmatpush1.bf16.msra.mxu0 0
    %668 = vmatprep.subr.bf16.mxu0 0
    %669 = vmatpush1.bf16.msra.mxu0 0
    %670 = vmatprep.subr.bf16.mxu0 0
    %671 = vmatpush1.bf16.msra.mxu0 0
    %672 = vmatprep.subr.bf16.mxu0 0
    %673 = vmatpush1.bf16.msra.mxu0 0
    %674 = vmatprep.subr.bf16.mxu0 0
    %675 = vmatpush1.bf16.msra.mxu0 0
    %676 = vmatprep.subr.bf16.mxu0 0
    %677 = vmatpush1.bf16.msra.mxu0 0
    %678 = vmatprep.subr.bf16.mxu0 0
    %679 = vmatpush1.bf16.msra.mxu0 0
    %680 = vmatprep.subr.bf16.mxu0 0
    %681 = vmatpush1.bf16.msra.mxu0 0
    %682 = vmatprep.subr.bf16.mxu0 0
    %683 = vmatpush1.bf16.msra.mxu0 0
    %684 = vmatprep.subr.bf16.mxu0 0
    %685 = vmatpush1.bf16.msra.mxu0 0
    %686 = vmatprep.mubr.bf16.mxu0 0
    %687 = vmatmul.mubr.bf16.gmra.mrb[0].mxu0 %v525
    %v688 = vpop.f32.mrb[0].mxu0
    %v689 = vadd.f32 0.0, %v688
    %v690 = vpop.f32.mrb[0].mxu0
    %v691 = vadd.f32 0.0, %v690
    %v692 = vpop.f32.mrb[0].mxu0
    %v693 = vadd.f32 0.0, %v692
    %v694 = vpop.f32.mrb[0].mxu0
    %v695 = vadd.f32 0.0, %v694
    %696 = vmatprep.mubr.bf16.mxu0 0
    %697 = vmatmul.mubr.bf16.gmra.mrb[0].mxu0 %v528
    %v698 = vpop.f32.mrb[0].mxu0
    %v699 = vadd.f32 0.0, %v698
    %v700 = vpop.f32.mrb[0].mxu0
    %v701 = vadd.f32 0.0, %v700
    %v702 = vpop.f32.mrb[0].mxu0
    %v703 = vadd.f32 0.0, %v702
    %v704 = vpop.f32.mrb[0].mxu0
    %v705 = vadd.f32 0.0, %v704
    %706 = vdwg.mxu0
    %v707 = vadd.f32 %v364, %v583
    %v708 = vadd.f32 %v366, %v585
    %v709 = vadd.f32 %v417, %v636
    %v710 = vadd.f32 %v419, %v638
    %v711 = vadd.f32 %v470, %v689
    %v712 = vadd.f32 %v472, %v691
    %v713 = vadd.f32 %v368, %v587
    %v714 = vadd.f32 %v370, %v589
    %v715 = vadd.f32 %v421, %v640
    %v716 = vadd.f32 %v423, %v642
    %v717 = vadd.f32 %v474, %v693
    %v718 = vadd.f32 %v476, %v695
    %v719 = vadd.f32 %v374, %v593
    %v720 = vadd.f32 %v376, %v595
    %v721 = vadd.f32 %v427, %v646
    %v722 = vadd.f32 %v429, %v648
    %v723 = vadd.f32 %v480, %v699
    %v724 = vadd.f32 %v482, %v701
    %v725 = vadd.f32 %v378, %v597
    %v726 = vadd.f32 %v380, %v599
    %v727 = vadd.f32 %v431, %v650
    %v728 = vadd.f32 %v433, %v652
    %v729 = vadd.f32 %v484, %v703
    %v730 = vadd.f32 %v486, %v705
    %s731 = scalar_lea.vmem %s2, 48
    %v732 = vld [vmem:[%s731] sm:$0xf]
    %v733 = vld [vmem:[%s731 + $0x4] sm:$0xf]
    %v734 = vld [vmem:[%s731 + $0x8] sm:$0xf]
    %v735 = vld [vmem:[%s731 + $0xc] sm:$0xf]
    %v740 = vunpack.c.l.b16 %v732
    %v741 = vunpack.c.l.b16 %v733
    %v742 = vunpack.c.l.b16 %v734
    %v743 = vunpack.c.l.b16 %v735
    %v744 = vpack.c.b16 %v741, %v740
    %v745 = vpack.c.b16 %v743, %v742
    %746 = vrot.lane.b32.xlu0 %v63, 110
    %v747 = vpop.permute.xlu0 %746
    %748 = vrot.lane.b32.xlu0 %v64, 110
    %v749 = vpop.permute.xlu0 %748
    %750 = vrot.lane.b32.xlu0 %v65, 110
    %v751 = vpop.permute.xlu0 %750
    %752 = vrot.lane.b32.xlu0 %v66, 110
    %v753 = vpop.permute.xlu0 %752
    %754 = vrot.lane.b32.xlu0 %v67, 110
    %v755 = vpop.permute.xlu0 %754
    %756 = vrot.lane.b32.xlu0 %v68, 110
    %v757 = vpop.permute.xlu0 %756
    %758 = vrot.lane.b32.xlu0 %v53, 110
    %v759 = vpop.permute.xlu0 %758
    %vm760 = vcmask 900096
    %v761 = vsel %vm760, %v747, %v749
    %v762 = vsel %vm760, %v749, %v751
    %v763 = vsel %vm760, %v751, %v753
    %v764 = vsel %vm760, %v753, %v755
    %v765 = vsel %vm760, %v755, %v757
    %v766 = vsel %vm760, %v757, %v759
    %v768 = vsel %vm110, %v744, 0
    %v771 = vsel %vm110, %v745, 0
    %v774 = vsel %vm117, %v761, 0
    %v777 = vsel %vm117, %v762, 0
    %v780 = vsel %vm117, %v763, 0
    %v783 = vsel %vm117, %v764, 0
    %v786 = vsel %vm117, %v765, 0
    %v789 = vsel %vm117, %v766, 0
    %791 = vmatprep.subr.bf16.mxu0 %v777
    %792 = vmatpush1.bf16.msra.mxu0 %v774
    %793 = vmatprep.subr.bf16.mxu0 0
    %794 = vmatpush1.bf16.msra.mxu0 0
    %795 = vmatprep.subr.bf16.mxu0 0
    %796 = vmatpush1.bf16.msra.mxu0 0
    %797 = vmatprep.subr.bf16.mxu0 0
    %798 = vmatpush1.bf16.msra.mxu0 0
    %799 = vmatprep.subr.bf16.mxu0 0
    %800 = vmatpush1.bf16.msra.mxu0 0
    %801 = vmatprep.subr.bf16.mxu0 0
    %802 = vmatpush1.bf16.msra.mxu0 0
    %803 = vmatprep.subr.bf16.mxu0 0
    %804 = vmatpush1.bf16.msra.mxu0 0
    %805 = vmatprep.subr.bf16.mxu0 0
    %806 = vmatpush1.bf16.msra.mxu0 0
    %807 = vmatprep.subr.bf16.mxu0 0
    %808 = vmatpush1.bf16.msra.mxu0 0
    %809 = vmatprep.subr.bf16.mxu0 0
    %810 = vmatpush1.bf16.msra.mxu0 0
    %811 = vmatprep.subr.bf16.mxu0 0
    %812 = vmatpush1.bf16.msra.mxu0 0
    %813 = vmatprep.subr.bf16.mxu0 0
    %814 = vmatpush1.bf16.msra.mxu0 0
    %815 = vmatprep.subr.bf16.mxu0 0
    %816 = vmatpush1.bf16.msra.mxu0 0
    %817 = vmatprep.subr.bf16.mxu0 0
    %818 = vmatpush1.bf16.msra.mxu0 0
    %819 = vmatprep.subr.bf16.mxu0 0
    %820 = vmatpush1.bf16.msra.mxu0 0
    %821 = vmatprep.subr.bf16.mxu0 0
    %822 = vmatpush1.bf16.msra.mxu0 0
    %823 = vmatprep.mubr.bf16.mxu0 0
    %824 = vmatmul.mubr.bf16.gmra.mrb[0].mxu0 %v768
    %v825 = vpop.f32.mrb[0].mxu0
    %v826 = vadd.f32 0.0, %v825
    %v827 = vpop.f32.mrb[0].mxu0
    %v828 = vadd.f32 0.0, %v827
    %v829 = vpop.f32.mrb[0].mxu0
    %v830 = vadd.f32 0.0, %v829
    %v831 = vpop.f32.mrb[0].mxu0
    %v832 = vadd.f32 0.0, %v831
    %833 = vmatprep.mubr.bf16.mxu0 0
    %834 = vmatmul.mubr.bf16.gmra.mrb[0].mxu0 %v771
    %v835 = vpop.f32.mrb[0].mxu0
    %v836 = vadd.f32 0.0, %v835
    %v837 = vpop.f32.mrb[0].mxu0
    %v838 = vadd.f32 0.0, %v837
    %v839 = vpop.f32.mrb[0].mxu0
    %v840 = vadd.f32 0.0, %v839
    %v841 = vpop.f32.mrb[0].mxu0
    %v842 = vadd.f32 0.0, %v841
    %843 = vdwg.mxu0
    %844 = vmatprep.subr.bf16.mxu0 %v783
    %845 = vmatpush1.bf16.msra.mxu0 %v780
    %846 = vmatprep.subr.bf16.mxu0 0
    %847 = vmatpush1.bf16.msra.mxu0 0
    %848 = vmatprep.subr.bf16.mxu0 0
    %849 = vmatpush1.bf16.msra.mxu0 0
    %850 = vmatprep.subr.bf16.mxu0 0
    %851 = vmatpush1.bf16.msra.mxu0 0
    %852 = vmatprep.subr.bf16.mxu0 0
    %853 = vmatpush1.bf16.msra.mxu0 0
    %854 = vmatprep.subr.bf16.mxu0 0
    %855 = vmatpush1.bf16.msra.mxu0 0
    %856 = vmatprep.subr.bf16.mxu0 0
    %857 = vmatpush1.bf16.msra.mxu0 0
    %858 = vmatprep.subr.bf16.mxu0 0
    %859 = vmatpush1.bf16.msra.mxu0 0
    %860 = vmatprep.subr.bf16.mxu0 0
    %861 = vmatpush1.bf16.msra.mxu0 0
    %862 = vmatprep.subr.bf16.mxu0 0
    %863 = vmatpush1.bf16.msra.mxu0 0
    %864 = vmatprep.subr.bf16.mxu0 0
    %865 = vmatpush1.bf16.msra.mxu0 0
    %866 = vmatprep.subr.bf16.mxu0 0
    %867 = vmatpush1.bf16.msra.mxu0 0
    %868 = vmatprep.subr.bf16.mxu0 0
    %869 = vmatpush1.bf16.msra.mxu0 0
    %870 = vmatprep.subr.bf16.mxu0 0
    %871 = vmatpush1.bf16.msra.mxu0 0
    %872 = vmatprep.subr.bf16.mxu0 0
    %873 = vmatpush1.bf16.msra.mxu0 0
    %874 = vmatprep.subr.bf16.mxu0 0
    %875 = vmatpush1.bf16.msra.mxu0 0
    %876 = vmatprep.mubr.bf16.mxu0 0
    %877 = vmatmul.mubr.bf16.gmra.mrb[0].mxu0 %v768
    %v878 = vpop.f32.mrb[0].mxu0
    %v879 = vadd.f32 0.0, %v878
    %v880 = vpop.f32.mrb[0].mxu0
    %v881 = vadd.f32 0.0, %v880
    %v882 = vpop.f32.mrb[0].mxu0
    %v883 = vadd.f32 0.0, %v882
    %v884 = vpop.f32.mrb[0].mxu0
    %v885 = vadd.f32 0.0, %v884
    %886 = vmatprep.mubr.bf16.mxu0 0
    %887 = vmatmul.mubr.bf16.gmra.mrb[0].mxu0 %v771
    %v888 = vpop.f32.mrb[0].mxu0
    %v889 = vadd.f32 0.0, %v888
    %v890 = vpop.f32.mrb[0].mxu0
    %v891 = vadd.f32 0.0, %v890
    %v892 = vpop.f32.mrb[0].mxu0
    %v893 = vadd.f32 0.0, %v892
    %v894 = vpop.f32.mrb[0].mxu0
    %v895 = vadd.f32 0.0, %v894
    %896 = vdwg.mxu0
    %897 = vmatprep.subr.bf16.mxu0 %v789
    %898 = vmatpush1.bf16.msra.mxu0 %v786
    %899 = vmatprep.subr.bf16.mxu0 0
    %900 = vmatpush1.bf16.msra.mxu0 0
    %901 = vmatprep.subr.bf16.mxu0 0
    %902 = vmatpush1.bf16.msra.mxu0 0
    %903 = vmatprep.subr.bf16.mxu0 0
    %904 = vmatpush1.bf16.msra.mxu0 0
    %905 = vmatprep.subr.bf16.mxu0 0
    %906 = vmatpush1.bf16.msra.mxu0 0
    %907 = vmatprep.subr.bf16.mxu0 0
    %908 = vmatpush1.bf16.msra.mxu0 0
    %909 = vmatprep.subr.bf16.mxu0 0
    %910 = vmatpush1.bf16.msra.mxu0 0
    %911 = vmatprep.subr.bf16.mxu0 0
    %912 = vmatpush1.bf16.msra.mxu0 0
    %913 = vmatprep.subr.bf16.mxu0 0
    %914 = vmatpush1.bf16.msra.mxu0 0
    %915 = vmatprep.subr.bf16.mxu0 0
    %916 = vmatpush1.bf16.msra.mxu0 0
    %917 = vmatprep.subr.bf16.mxu0 0
    %918 = vmatpush1.bf16.msra.mxu0 0
    %919 = vmatprep.subr.bf16.mxu0 0
    %920 = vmatpush1.bf16.msra.mxu0 0
    %921 = vmatprep.subr.bf16.mxu0 0
    %922 = vmatpush1.bf16.msra.mxu0 0
    %923 = vmatprep.subr.bf16.mxu0 0
    %924 = vmatpush1.bf16.msra.mxu0 0
    %925 = vmatprep.subr.bf16.mxu0 0
    %926 = vmatpush1.bf16.msra.mxu0 0
    %927 = vmatprep.subr.bf16.mxu0 0
    %928 = vmatpush1.bf16.msra.mxu0 0
    %929 = vmatprep.mubr.bf16.mxu0 0
    %930 = vmatmul.mubr.bf16.gmra.mrb[0].mxu0 %v768
    %v931 = vpop.f32.mrb[0].mxu0
    %v932 = vadd.f32 0.0, %v931
    %v933 = vpop.f32.mrb[0].mxu0
    %v934 = vadd.f32 0.0, %v933
    %v935 = vpop.f32.mrb[0].mxu0
    %v936 = vadd.f32 0.0, %v935
    %v937 = vpop.f32.mrb[0].mxu0
    %v938 = vadd.f32 0.0, %v937
    %939 = vmatprep.mubr.bf16.mxu0 0
    %940 = vmatmul.mubr.bf16.gmra.mrb[0].mxu0 %v771
    %v941 = vpop.f32.mrb[0].mxu0
    %v942 = vadd.f32 0.0, %v941
    %v943 = vpop.f32.mrb[0].mxu0
    %v944 = vadd.f32 0.0, %v943
    %v945 = vpop.f32.mrb[0].mxu0
    %v946 = vadd.f32 0.0, %v945
    %v947 = vpop.f32.mrb[0].mxu0
    %v948 = vadd.f32 0.0, %v947
    %949 = vdwg.mxu0
    %v950 = vadd.f32 %v707, %v826
    %v951 = vadd.f32 %v708, %v828
    %v952 = vadd.f32 %v709, %v879
    %v953 = vadd.f32 %v710, %v881
    %v954 = vadd.f32 %v711, %v932
    %v955 = vadd.f32 %v712, %v934
    %v956 = vadd.f32 %v713, %v830
    %v957 = vadd.f32 %v714, %v832
    %v958 = vadd.f32 %v715, %v883
    %v959 = vadd.f32 %v716, %v885
    %v960 = vadd.f32 %v717, %v936
    %v961 = vadd.f32 %v718, %v938
    %v962 = vadd.f32 %v719, %v836
    %v963 = vadd.f32 %v720, %v838
    %v964 = vadd.f32 %v721, %v889
    %v965 = vadd.f32 %v722, %v891
    %v966 = vadd.f32 %v723, %v942
    %v967 = vadd.f32 %v724, %v944
    %v968 = vadd.f32 %v725, %v840
    %v969 = vadd.f32 %v726, %v842
    %v970 = vadd.f32 %v727, %v893
    %v971 = vadd.f32 %v728, %v895
    %v972 = vadd.f32 %v729, %v946
    %v973 = vadd.f32 %v730, %v948
    %s974 = scalar_lea.vmem %s2, 64
    %v975 = vld [vmem:[%s974] sm:$0xf]
    %v976 = vld [vmem:[%s974 + $0x4] sm:$0xf]
    %v977 = vld [vmem:[%s974 + $0x8] sm:$0xf]
    %v978 = vld [vmem:[%s974 + $0xc] sm:$0xf]
    %v983 = vunpack.c.l.b16 %v975
    %v984 = vunpack.c.l.b16 %v976
    %v985 = vunpack.c.l.b16 %v977
    %v986 = vunpack.c.l.b16 %v978
    %v987 = vpack.c.b16 %v984, %v983
    %v988 = vpack.c.b16 %v986, %v985
    %989 = vrot.lane.b32.xlu0 %v63, 109
    %v990 = vpop.permute.xlu0 %989
    %991 = vrot.lane.b32.xlu0 %v64, 109
    %v992 = vpop.permute.xlu0 %991
    %993 = vrot.lane.b32.xlu0 %v65, 109
    %v994 = vpop.permute.xlu0 %993
    %995 = vrot.lane.b32.xlu0 %v66, 109
    %v996 = vpop.permute.xlu0 %995
    %997 = vrot.lane.b32.xlu0 %v67, 109
    %v998 = vpop.permute.xlu0 %997
    %999 = vrot.lane.b32.xlu0 %v68, 109
    %v1000 = vpop.permute.xlu0 %999
    %1001 = vrot.lane.b32.xlu0 %v53, 109
    %v1002 = vpop.permute.xlu0 %1001
    %vm1003 = vcmask 891904
    %v1004 = vsel %vm1003, %v990, %v992
    %v1005 = vsel %vm1003, %v992, %v994
    %v1006 = vsel %vm1003, %v994, %v996
    %v1007 = vsel %vm1003, %v996, %v998
    %v1008 = vsel %vm1003, %v998, %v1000
    %v1009 = vsel %vm1003, %v1000, %v1002
    %v1011 = vsel %vm110, %v987, 0
    %v1014 = vsel %vm110, %v988, 0
    %v1017 = vsel %vm117, %v1004, 0
    %v1020 = vsel %vm117, %v1005, 0
    %v1023 = vsel %vm117, %v1006, 0
    %v1026 = vsel %vm117, %v1007, 0
    %v1029 = vsel %vm117, %v1008, 0
    %v1032 = vsel %vm117, %v1009, 0
    %1034 = vmatprep.subr.bf16.mxu0 %v1020
    %1035 = vmatpush1.bf16.msra.mxu0 %v1017
    %1036 = vmatprep.subr.bf16.mxu0 0
    %1037 = vmatpush1.bf16.msra.mxu0 0
    %1038 = vmatprep.subr.bf16.mxu0 0
    %1039 = vmatpush1.bf16.msra.mxu0 0
    %1040 = vmatprep.subr.bf16.mxu0 0
    %1041 = vmatpush1.bf16.msra.mxu0 0
    %1042 = vmatprep.subr.bf16.mxu0 0
    %1043 = vmatpush1.bf16.msra.mxu0 0
    %1044 = vmatprep.subr.bf16.mxu0 0
    %1045 = vmatpush1.bf16.msra.mxu0 0
    %1046 = vmatprep.subr.bf16.mxu0 0
    %1047 = vmatpush1.bf16.msra.mxu0 0
    %1048 = vmatprep.subr.bf16.mxu0 0
    %1049 = vmatpush1.bf16.msra.mxu0 0
    %1050 = vmatprep.subr.bf16.mxu0 0
    %1051 = vmatpush1.bf16.msra.mxu0 0
    %1052 = vmatprep.subr.bf16.mxu0 0
    %1053 = vmatpush1.bf16.msra.mxu0 0
    %1054 = vmatprep.subr.bf16.mxu0 0
    %1055 = vmatpush1.bf16.msra.mxu0 0
    %1056 = vmatprep.subr.bf16.mxu0 0
    %1057 = vmatpush1.bf16.msra.mxu0 0
    %1058 = vmatprep.subr.bf16.mxu0 0
    %1059 = vmatpush1.bf16.msra.mxu0 0
    %1060 = vmatprep.subr.bf16.mxu0 0
    %1061 = vmatpush1.bf16.msra.mxu0 0
    %1062 = vmatprep.subr.bf16.mxu0 0
    %1063 = vmatpush1.bf16.msra.mxu0 0
    %1064 = vmatprep.subr.bf16.mxu0 0
    %1065 = vmatpush1.bf16.msra.mxu0 0
    %1066 = vmatprep.mubr.bf16.mxu0 0
    %1067 = vmatmul.mubr.bf16.gmra.mrb[0].mxu0 %v1011
    %v1068 = vpop.f32.mrb[0].mxu0
    %v1069 = vadd.f32 0.0, %v1068
    %v1070 = vpop.f32.mrb[0].mxu0
    %v1071 = vadd.f32 0.0, %v1070
    %v1072 = vpop.f32.mrb[0].mxu0
    %v1073 = vadd.f32 0.0, %v1072
    %v1074 = vpop.f32.mrb[0].mxu0
    %v1075 = vadd.f32 0.0, %v1074
    %1076 = vmatprep.mubr.bf16.mxu0 0
    %1077 = vmatmul.mubr.bf16.gmra.mrb[0].mxu0 %v1014
    %v1078 = vpop.f32.mrb[0].mxu0
    %v1079 = vadd.f32 0.0, %v1078
    %v1080 = vpop.f32.mrb[0].mxu0
    %v1081 = vadd.f32 0.0, %v1080
    %v1082 = vpop.f32.mrb[0].mxu0
    %v1083 = vadd.f32 0.0, %v1082
    %v1084 = vpop.f32.mrb[0].mxu0
    %v1085 = vadd.f32 0.0, %v1084
    %1086 = vdwg.mxu0
    %1087 = vmatprep.subr.bf16.mxu0 %v1026
    %1088 = vmatpush1.bf16.msra.mxu0 %v1023
    %1089 = vmatprep.subr.bf16.mxu0 0
    %1090 = vmatpush1.bf16.msra.mxu0 0
    %1091 = vmatprep.subr.bf16.mxu0 0
    %1092 = vmatpush1.bf16.msra.mxu0 0
    %1093 = vmatprep.subr.bf16.mxu0 0
    %1094 = vmatpush1.bf16.msra.mxu0 0
    %1095 = vmatprep.subr.bf16.mxu0 0
    %1096 = vmatpush1.bf16.msra.mxu0 0
    %1097 = vmatprep.subr.bf16.mxu0 0
    %1098 = vmatpush1.bf16.msra.mxu0 0
    %1099 = vmatprep.subr.bf16.mxu0 0
    %1100 = vmatpush1.bf16.msra.mxu0 0
    %1101 = vmatprep.subr.bf16.mxu0 0
    %1102 = vmatpush1.bf16.msra.mxu0 0
    %1103 = vmatprep.subr.bf16.mxu0 0
    %1104 = vmatpush1.bf16.msra.mxu0 0
    %1105 = vmatprep.subr.bf16.mxu0 0
    %1106 = vmatpush1.bf16.msra.mxu0 0
    %1107 = vmatprep.subr.bf16.mxu0 0
    %1108 = vmatpush1.bf16.msra.mxu0 0
    %1109 = vmatprep.subr.bf16.mxu0 0
    %1110 = vmatpush1.bf16.msra.mxu0 0
    %1111 = vmatprep.subr.bf16.mxu0 0
    %1112 = vmatpush1.bf16.msra.mxu0 0
    %1113 = vmatprep.subr.bf16.mxu0 0
    %1114 = vmatpush1.bf16.msra.mxu0 0
    %1115 = vmatprep.subr.bf16.mxu0 0
    %1116 = vmatpush1.bf16.msra.mxu0 0
    %1117 = vmatprep.subr.bf16.mxu0 0
    %1118 = vmatpush1.bf16.msra.mxu0 0
    %1119 = vmatprep.mubr.bf16.mxu0 0
    %1120 = vmatmul.mubr.bf16.gmra.mrb[0].mxu0 %v1011
    %v1121 = vpop.f32.mrb[0].mxu0
    %v1122 = vadd.f32 0.0, %v1121
    %v1123 = vpop.f32.mrb[0].mxu0
    %v1124 = vadd.f32 0.0, %v1123
    %v1125 = vpop.f32.mrb[0].mxu0
    %v1126 = vadd.f32 0.0, %v1125
    %v1127 = vpop.f32.mrb[0].mxu0
    %v1128 = vadd.f32 0.0, %v1127
    %1129 = vmatprep.mubr.bf16.mxu0 0
    %1130 = vmatmul.mubr.bf16.gmra.mrb[0].mxu0 %v1014
    %v1131 = vpop.f32.mrb[0].mxu0
    %v1132 = vadd.f32 0.0, %v1131
    %v1133 = vpop.f32.mrb[0].mxu0
    %v1134 = vadd.f32 0.0, %v1133
    %v1135 = vpop.f32.mrb[0].mxu0
    %v1136 = vadd.f32 0.0, %v1135
    %v1137 = vpop.f32.mrb[0].mxu0
    %v1138 = vadd.f32 0.0, %v1137
    %1139 = vdwg.mxu0
    %1140 = vmatprep.subr.bf16.mxu0 %v1032
    %1141 = vmatpush1.bf16.msra.mxu0 %v1029
    %1142 = vmatprep.subr.bf16.mxu0 0
    %1143 = vmatpush1.bf16.msra.mxu0 0
    %1144 = vmatprep.subr.bf16.mxu0 0
    %1145 = vmatpush1.bf16.msra.mxu0 0
    %1146 = vmatprep.subr.bf16.mxu0 0
    %1147 = vmatpush1.bf16.msra.mxu0 0
    %1148 = vmatprep.subr.bf16.mxu0 0
    %1149 = vmatpush1.bf16.msra.mxu0 0
    %1150 = vmatprep.subr.bf16.mxu0 0
    %1151 = vmatpush1.bf16.msra.mxu0 0
    %1152 = vmatprep.subr.bf16.mxu0 0
    %1153 = vmatpush1.bf16.msra.mxu0 0
    %1154 = vmatprep.subr.bf16.mxu0 0
    %1155 = vmatpush1.bf16.msra.mxu0 0
    %1156 = vmatprep.subr.bf16.mxu0 0
    %1157 = vmatpush1.bf16.msra.mxu0 0
    %1158 = vmatprep.subr.bf16.mxu0 0
    %1159 = vmatpush1.bf16.msra.mxu0 0
    %1160 = vmatprep.subr.bf16.mxu0 0
    %1161 = vmatpush1.bf16.msra.mxu0 0
    %1162 = vmatprep.subr.bf16.mxu0 0
    %1163 = vmatpush1.bf16.msra.mxu0 0
    %1164 = vmatprep.subr.bf16.mxu0 0
    %1165 = vmatpush1.bf16.msra.mxu0 0
    %1166 = vmatprep.subr.bf16.mxu0 0
    %1167 = vmatpush1.bf16.msra.mxu0 0
    %1168 = vmatprep.subr.bf16.mxu0 0
    %1169 = vmatpush1.bf16.msra.mxu0 0
    %1170 = vmatprep.subr.bf16.mxu0 0
    %1171 = vmatpush1.bf16.msra.mxu0 0
    %1172 = vmatprep.mubr.bf16.mxu0 0
    %1173 = vmatmul.mubr.bf16.gmra.mrb[0].mxu0 %v1011
    %v1174 = vpop.f32.mrb[0].mxu0
    %v1175 = vadd.f32 0.0, %v1174
    %v1176 = vpop.f32.mrb[0].mxu0
    %v1177 = vadd.f32 0.0, %v1176
    %v1178 = vpop.f32.mrb[0].mxu0
    %v1179 = vadd.f32 0.0, %v1178
    %v1180 = vpop.f32.mrb[0].mxu0
    %v1181 = vadd.f32 0.0, %v1180
    %1182 = vmatprep.mubr.bf16.mxu0 0
    %1183 = vmatmul.mubr.bf16.gmra.mrb[0].mxu0 %v1014
    %v1184 = vpop.f32.mrb[0].mxu0
    %v1185 = vadd.f32 0.0, %v1184
    %v1186 = vpop.f32.mrb[0].mxu0
    %v1187 = vadd.f32 0.0, %v1186
    %v1188 = vpop.f32.mrb[0].mxu0
    %v1189 = vadd.f32 0.0, %v1188
    %v1190 = vpop.f32.mrb[0].mxu0
    %v1191 = vadd.f32 0.0, %v1190
    %1192 = vdwg.mxu0
    %v1193 = vadd.f32 %v950, %v1069
    %v1194 = vadd.f32 %v951, %v1071
    %v1195 = vadd.f32 %v952, %v1122
    %v1196 = vadd.f32 %v953, %v1124
    %v1197 = vadd.f32 %v954, %v1175
    %v1198 = vadd.f32 %v955, %v1177
    %v1199 = vadd.f32 %v956, %v1073
    %v1200 = vadd.f32 %v957, %v1075
    %v1201 = vadd.f32 %v958, %v1126
    %v1202 = vadd.f32 %v959, %v1128
    %v1203 = vadd.f32 %v960, %v1179
    %v1204 = vadd.f32 %v961, %v1181
    %v1205 = vadd.f32 %v962, %v1079
    %v1206 = vadd.f32 %v963, %v1081
    %v1207 = vadd.f32 %v964, %v1132
    %v1208 = vadd.f32 %v965, %v1134
    %v1209 = vadd.f32 %v966, %v1185
    %v1210 = vadd.f32 %v967, %v1187
    %v1211 = vadd.f32 %v968, %v1083
    %v1212 = vadd.f32 %v969, %v1085
    %v1213 = vadd.f32 %v970, %v1136
    %v1214 = vadd.f32 %v971, %v1138
    %v1215 = vadd.f32 %v972, %v1189
    %v1216 = vadd.f32 %v973, %v1191
    %s1217 = scalar_lea.vmem %s2, 80
    %v1218 = vld [vmem:[%s1217] sm:$0xf]
    %v1219 = vld [vmem:[%s1217 + $0x4] sm:$0xf]
    %v1220 = vld [vmem:[%s1217 + $0x8] sm:$0xf]
    %v1221 = vld [vmem:[%s1217 + $0xc] sm:$0xf]
    %v1226 = vunpack.c.l.b16 %v1218
    %v1227 = vunpack.c.l.b16 %v1219
    %v1228 = vunpack.c.l.b16 %v1220
    %v1229 = vunpack.c.l.b16 %v1221
    %v1230 = vpack.c.b16 %v1227, %v1226
    %v1231 = vpack.c.b16 %v1229, %v1228
    %1232 = vrot.lane.b32.xlu0 %v63, 108
    %v1233 = vpop.permute.xlu0 %1232
    %1234 = vrot.lane.b32.xlu0 %v64, 108
    %v1235 = vpop.permute.xlu0 %1234
    %1236 = vrot.lane.b32.xlu0 %v65, 108
    %v1237 = vpop.permute.xlu0 %1236
    %1238 = vrot.lane.b32.xlu0 %v66, 108
    %v1239 = vpop.permute.xlu0 %1238
    %1240 = vrot.lane.b32.xlu0 %v67, 108
    %v1241 = vpop.permute.xlu0 %1240
    %1242 = vrot.lane.b32.xlu0 %v68, 108
    %v1243 = vpop.permute.xlu0 %1242
    %1244 = vrot.lane.b32.xlu0 %v53, 108
    %v1245 = vpop.permute.xlu0 %1244
    %vm1246 = vcmask 883712
    %v1247 = vsel %vm1246, %v1233, %v1235
    %v1248 = vsel %vm1246, %v1235, %v1237
    %v1249 = vsel %vm1246, %v1237, %v1239
    %v1250 = vsel %vm1246, %v1239, %v1241
    %v1251 = vsel %vm1246, %v1241, %v1243
    %v1252 = vsel %vm1246, %v1243, %v1245
    %v1254 = vsel %vm110, %v1230, 0
    %v1257 = vsel %vm110, %v1231, 0
    %v1260 = vsel %vm117, %v1247, 0
    %v1263 = vsel %vm117, %v1248, 0
    %v1266 = vsel %vm117, %v1249, 0
    %v1269 = vsel %vm117, %v1250, 0
    %v1272 = vsel %vm117, %v1251, 0
    %v1275 = vsel %vm117, %v1252, 0
    %1277 = vmatprep.subr.bf16.mxu0 %v1263
    %1278 = vmatpush1.bf16.msra.mxu0 %v1260
    %1279 = vmatprep.subr.bf16.mxu0 0
    %1280 = vmatpush1.bf16.msra.mxu0 0
    %1281 = vmatprep.subr.bf16.mxu0 0
    %1282 = vmatpush1.bf16.msra.mxu0 0
    %1283 = vmatprep.subr.bf16.mxu0 0
    %1284 = vmatpush1.bf16.msra.mxu0 0
    %1285 = vmatprep.subr.bf16.mxu0 0
    %1286 = vmatpush1.bf16.msra.mxu0 0
    %1287 = vmatprep.subr.bf16.mxu0 0
    %1288 = vmatpush1.bf16.msra.mxu0 0
    %1289 = vmatprep.subr.bf16.mxu0 0
    %1290 = vmatpush1.bf16.msra.mxu0 0
    %1291 = vmatprep.subr.bf16.mxu0 0
    %1292 = vmatpush1.bf16.msra.mxu0 0
    %1293 = vmatprep.subr.bf16.mxu0 0
    %1294 = vmatpush1.bf16.msra.mxu0 0
    %1295 = vmatprep.subr.bf16.mxu0 0
    %1296 = vmatpush1.bf16.msra.mxu0 0
    %1297 = vmatprep.subr.bf16.mxu0 0
    %1298 = vmatpush1.bf16.msra.mxu0 0
    %1299 = vmatprep.subr.bf16.mxu0 0
    %1300 = vmatpush1.bf16.msra.mxu0 0
    %1301 = vmatprep.subr.bf16.mxu0 0
    %1302 = vmatpush1.bf16.msra.mxu0 0
    %1303 = vmatprep.subr.bf16.mxu0 0
    %1304 = vmatpush1.bf16.msra.mxu0 0
    %1305 = vmatprep.subr.bf16.mxu0 0
    %1306 = vmatpush1.bf16.msra.mxu0 0
    %1307 = vmatprep.subr.bf16.mxu0 0
    %1308 = vmatpush1.bf16.msra.mxu0 0
    %1309 = vmatprep.mubr.bf16.mxu0 0
    %1310 = vmatmul.mubr.bf16.gmra.mrb[0].mxu0 %v1254
    %v1311 = vpop.f32.mrb[0].mxu0
    %v1312 = vadd.f32 0.0, %v1311
    %v1313 = vpop.f32.mrb[0].mxu0
    %v1314 = vadd.f32 0.0, %v1313
    %v1315 = vpop.f32.mrb[0].mxu0
    %v1316 = vadd.f32 0.0, %v1315
    %v1317 = vpop.f32.mrb[0].mxu0
    %v1318 = vadd.f32 0.0, %v1317
    %1319 = vmatprep.mubr.bf16.mxu0 0
    %1320 = vmatmul.mubr.bf16.gmra.mrb[0].mxu0 %v1257
    %v1321 = vpop.f32.mrb[0].mxu0
    %v1322 = vadd.f32 0.0, %v1321
    %v1323 = vpop.f32.mrb[0].mxu0
    %v1324 = vadd.f32 0.0, %v1323
    %v1325 = vpop.f32.mrb[0].mxu0
    %v1326 = vadd.f32 0.0, %v1325
    %v1327 = vpop.f32.mrb[0].mxu0
    %v1328 = vadd.f32 0.0, %v1327
    %1329 = vdwg.mxu0
    %1330 = vmatprep.subr.bf16.mxu0 %v1269
    %1331 = vmatpush1.bf16.msra.mxu0 %v1266
    %1332 = vmatprep.subr.bf16.mxu0 0
    %1333 = vmatpush1.bf16.msra.mxu0 0
    %1334 = vmatprep.subr.bf16.mxu0 0
    %1335 = vmatpush1.bf16.msra.mxu0 0
    %1336 = vmatprep.subr.bf16.mxu0 0
    %1337 = vmatpush1.bf16.msra.mxu0 0
    %1338 = vmatprep.subr.bf16.mxu0 0
    %1339 = vmatpush1.bf16.msra.mxu0 0
    %1340 = vmatprep.subr.bf16.mxu0 0
    %1341 = vmatpush1.bf16.msra.mxu0 0
    %1342 = vmatprep.subr.bf16.mxu0 0
    %1343 = vmatpush1.bf16.msra.mxu0 0
    %1344 = vmatprep.subr.bf16.mxu0 0
    %1345 = vmatpush1.bf16.msra.mxu0 0
    %1346 = vmatprep.subr.bf16.mxu0 0
    %1347 = vmatpush1.bf16.msra.mxu0 0
    %1348 = vmatprep.subr.bf16.mxu0 0
    %1349 = vmatpush1.bf16.msra.mxu0 0
    %1350 = vmatprep.subr.bf16.mxu0 0
    %1351 = vmatpush1.bf16.msra.mxu0 0
    %1352 = vmatprep.subr.bf16.mxu0 0
    %1353 = vmatpush1.bf16.msra.mxu0 0
    %1354 = vmatprep.subr.bf16.mxu0 0
    %1355 = vmatpush1.bf16.msra.mxu0 0
    %1356 = vmatprep.subr.bf16.mxu0 0
    %1357 = vmatpush1.bf16.msra.mxu0 0
    %1358 = vmatprep.subr.bf16.mxu0 0
    %1359 = vmatpush1.bf16.msra.mxu0 0
    %1360 = vmatprep.subr.bf16.mxu0 0
    %1361 = vmatpush1.bf16.msra.mxu0 0
    %1362 = vmatprep.mubr.bf16.mxu0 0
    %1363 = vmatmul.mubr.bf16.gmra.mrb[0].mxu0 %v1254
    %v1364 = vpop.f32.mrb[0].mxu0
    %v1365 = vadd.f32 0.0, %v1364
    %v1366 = vpop.f32.mrb[0].mxu0
    %v1367 = vadd.f32 0.0, %v1366
    %v1368 = vpop.f32.mrb[0].mxu0
    %v1369 = vadd.f32 0.0, %v1368
    %v1370 = vpop.f32.mrb[0].mxu0
    %v1371 = vadd.f32 0.0, %v1370
    %1372 = vmatprep.mubr.bf16.mxu0 0
    %1373 = vmatmul.mubr.bf16.gmra.mrb[0].mxu0 %v1257
    %v1374 = vpop.f32.mrb[0].mxu0
    %v1375 = vadd.f32 0.0, %v1374
    %v1376 = vpop.f32.mrb[0].mxu0
    %v1377 = vadd.f32 0.0, %v1376
    %v1378 = vpop.f32.mrb[0].mxu0
    %v1379 = vadd.f32 0.0, %v1378
    %v1380 = vpop.f32.mrb[0].mxu0
    %v1381 = vadd.f32 0.0, %v1380
    %1382 = vdwg.mxu0
    %1383 = vmatprep.subr.bf16.mxu0 %v1275
    %1384 = vmatpush1.bf16.msra.mxu0 %v1272
    %1385 = vmatprep.subr.bf16.mxu0 0
    %1386 = vmatpush1.bf16.msra.mxu0 0
    %1387 = vmatprep.subr.bf16.mxu0 0
    %1388 = vmatpush1.bf16.msra.mxu0 0
    %1389 = vmatprep.subr.bf16.mxu0 0
    %1390 = vmatpush1.bf16.msra.mxu0 0
    %1391 = vmatprep.subr.bf16.mxu0 0
    %1392 = vmatpush1.bf16.msra.mxu0 0
    %1393 = vmatprep.subr.bf16.mxu0 0
    %1394 = vmatpush1.bf16.msra.mxu0 0
    %1395 = vmatprep.subr.bf16.mxu0 0
    %1396 = vmatpush1.bf16.msra.mxu0 0
    %1397 = vmatprep.subr.bf16.mxu0 0
    %1398 = vmatpush1.bf16.msra.mxu0 0
    %1399 = vmatprep.subr.bf16.mxu0 0
    %1400 = vmatpush1.bf16.msra.mxu0 0
    %1401 = vmatprep.subr.bf16.mxu0 0
    %1402 = vmatpush1.bf16.msra.mxu0 0
    %1403 = vmatprep.subr.bf16.mxu0 0
    %1404 = vmatpush1.bf16.msra.mxu0 0
    %1405 = vmatprep.subr.bf16.mxu0 0
    %1406 = vmatpush1.bf16.msra.mxu0 0
    %1407 = vmatprep.subr.bf16.mxu0 0
    %1408 = vmatpush1.bf16.msra.mxu0 0
    %1409 = vmatprep.subr.bf16.mxu0 0
    %1410 = vmatpush1.bf16.msra.mxu0 0
    %1411 = vmatprep.subr.bf16.mxu0 0
    %1412 = vmatpush1.bf16.msra.mxu0 0
    %1413 = vmatprep.subr.bf16.mxu0 0
    %1414 = vmatpush1.bf16.msra.mxu0 0
    %1415 = vmatprep.mubr.bf16.mxu0 0
    %1416 = vmatmul.mubr.bf16.gmra.mrb[0].mxu0 %v1254
    %v1417 = vpop.f32.mrb[0].mxu0
    %v1418 = vadd.f32 0.0, %v1417
    %v1419 = vpop.f32.mrb[0].mxu0
    %v1420 = vadd.f32 0.0, %v1419
    %v1421 = vpop.f32.mrb[0].mxu0
    %v1422 = vadd.f32 0.0, %v1421
    %v1423 = vpop.f32.mrb[0].mxu0
    %v1424 = vadd.f32 0.0, %v1423
    %1425 = vmatprep.mubr.bf16.mxu0 0
    %1426 = vmatmul.mubr.bf16.gmra.mrb[0].mxu0 %v1257
    %v1427 = vpop.f32.mrb[0].mxu0
    %v1428 = vadd.f32 0.0, %v1427
    %v1429 = vpop.f32.mrb[0].mxu0
    %v1430 = vadd.f32 0.0, %v1429
    %v1431 = vpop.f32.mrb[0].mxu0
    %v1432 = vadd.f32 0.0, %v1431
    %v1433 = vpop.f32.mrb[0].mxu0
    %v1434 = vadd.f32 0.0, %v1433
    %1435 = vdwg.mxu0
    %v1436 = vadd.f32 %v1193, %v1312
    %v1437 = vadd.f32 %v1194, %v1314
    %v1438 = vadd.f32 %v1195, %v1365
    %v1439 = vadd.f32 %v1196, %v1367
    %v1440 = vadd.f32 %v1197, %v1418
    %v1441 = vadd.f32 %v1198, %v1420
    %v1442 = vadd.f32 %v1199, %v1316
    %v1443 = vadd.f32 %v1200, %v1318
    %v1444 = vadd.f32 %v1201, %v1369
    %v1445 = vadd.f32 %v1202, %v1371
    %v1446 = vadd.f32 %v1203, %v1422
    %v1447 = vadd.f32 %v1204, %v1424
    %v1448 = vadd.f32 %v1205, %v1322
    %v1449 = vadd.f32 %v1206, %v1324
    %v1450 = vadd.f32 %v1207, %v1375
    %v1451 = vadd.f32 %v1208, %v1377
    %v1452 = vadd.f32 %v1209, %v1428
    %v1453 = vadd.f32 %v1210, %v1430
    %v1454 = vadd.f32 %v1211, %v1326
    %v1455 = vadd.f32 %v1212, %v1328
    %v1456 = vadd.f32 %v1213, %v1379
    %v1457 = vadd.f32 %v1214, %v1381
    %v1458 = vadd.f32 %v1215, %v1432
    %v1459 = vadd.f32 %v1216, %v1434
    %s1460 = scalar_lea.vmem %s2, 96
    %v1461 = vld [vmem:[%s1460] sm:$0xf]
    %v1462 = vld [vmem:[%s1460 + $0x4] sm:$0xf]
    %v1463 = vld [vmem:[%s1460 + $0x8] sm:$0xf]
    %v1464 = vld [vmem:[%s1460 + $0xc] sm:$0xf]
    %v1469 = vunpack.c.l.b16 %v1461
    %v1470 = vunpack.c.l.b16 %v1462
    %v1471 = vunpack.c.l.b16 %v1463
    %v1472 = vunpack.c.l.b16 %v1464
    %v1473 = vpack.c.b16 %v1470, %v1469
    %v1474 = vpack.c.b16 %v1472, %v1471
    %1475 = vrot.lane.b32.xlu0 %v63, 92
    %v1476 = vpop.permute.xlu0 %1475
    %1477 = vrot.lane.b32.xlu0 %v64, 92
    %v1478 = vpop.permute.xlu0 %1477
    %1479 = vrot.lane.b32.xlu0 %v65, 92
    %v1480 = vpop.permute.xlu0 %1479
    %1481 = vrot.lane.b32.xlu0 %v66, 92
    %v1482 = vpop.permute.xlu0 %1481
    %1483 = vrot.lane.b32.xlu0 %v67, 92
    %v1484 = vpop.permute.xlu0 %1483
    %1485 = vrot.lane.b32.xlu0 %v68, 92
    %v1486 = vpop.permute.xlu0 %1485
    %1487 = vrot.lane.b32.xlu0 %v53, 92
    %v1488 = vpop.permute.xlu0 %1487
    %vm1489 = vcmask 752640
    %v1490 = vsel %vm1489, %v1476, %v1478
    %v1491 = vsel %vm1489, %v1478, %v1480
    %v1492 = vsel %vm1489, %v1480, %v1482
    %v1493 = vsel %vm1489, %v1482, %v1484
    %v1494 = vsel %vm1489, %v1484, %v1486
    %v1495 = vsel %vm1489, %v1486, %v1488
    %v1497 = vsel %vm110, %v1473, 0
    %v1500 = vsel %vm110, %v1474, 0
    %v1503 = vsel %vm117, %v1490, 0
    %v1506 = vsel %vm117, %v1491, 0
    %v1509 = vsel %vm117, %v1492, 0
    %v1512 = vsel %vm117, %v1493, 0
    %v1515 = vsel %vm117, %v1494, 0
    %v1518 = vsel %vm117, %v1495, 0
    %1520 = vmatprep.subr.bf16.mxu0 %v1506
    %1521 = vmatpush1.bf16.msra.mxu0 %v1503
    %1522 = vmatprep.subr.bf16.mxu0 0
    %1523 = vmatpush1.bf16.msra.mxu0 0
    %1524 = vmatprep.subr.bf16.mxu0 0
    %1525 = vmatpush1.bf16.msra.mxu0 0
    %1526 = vmatprep.subr.bf16.mxu0 0
    %1527 = vmatpush1.bf16.msra.mxu0 0
    %1528 = vmatprep.subr.bf16.mxu0 0
    %1529 = vmatpush1.bf16.msra.mxu0 0
    %1530 = vmatprep.subr.bf16.mxu0 0
    %1531 = vmatpush1.bf16.msra.mxu0 0
    %1532 = vmatprep.subr.bf16.mxu0 0
    %1533 = vmatpush1.bf16.msra.mxu0 0
    %1534 = vmatprep.subr.bf16.mxu0 0
    %1535 = vmatpush1.bf16.msra.mxu0 0
    %1536 = vmatprep.subr.bf16.mxu0 0
    %1537 = vmatpush1.bf16.msra.mxu0 0
    %1538 = vmatprep.subr.bf16.mxu0 0
    %1539 = vmatpush1.bf16.msra.mxu0 0
    %1540 = vmatprep.subr.bf16.mxu0 0
    %1541 = vmatpush1.bf16.msra.mxu0 0
    %1542 = vmatprep.subr.bf16.mxu0 0
    %1543 = vmatpush1.bf16.msra.mxu0 0
    %1544 = vmatprep.subr.bf16.mxu0 0
    %1545 = vmatpush1.bf16.msra.mxu0 0
    %1546 = vmatprep.subr.bf16.mxu0 0
    %1547 = vmatpush1.bf16.msra.mxu0 0
    %1548 = vmatprep.subr.bf16.mxu0 0
    %1549 = vmatpush1.bf16.msra.mxu0 0
    %1550 = vmatprep.subr.bf16.mxu0 0
    %1551 = vmatpush1.bf16.msra.mxu0 0
    %1552 = vmatprep.mubr.bf16.mxu0 0
    %1553 = vmatmul.mubr.bf16.gmra.mrb[0].mxu0 %v1497
    %v1554 = vpop.f32.mrb[0].mxu0
    %v1555 = vadd.f32 0.0, %v1554
    %v1556 = vpop.f32.mrb[0].mxu0
    %v1557 = vadd.f32 0.0, %v1556
    %v1558 = vpop.f32.mrb[0].mxu0
    %v1559 = vadd.f32 0.0, %v1558
    %v1560 = vpop.f32.mrb[0].mxu0
    %v1561 = vadd.f32 0.0, %v1560
    %1562 = vmatprep.mubr.bf16.mxu0 0
    %1563 = vmatmul.mubr.bf16.gmra.mrb[0].mxu0 %v1500
    %v1564 = vpop.f32.mrb[0].mxu0
    %v1565 = vadd.f32 0.0, %v1564
    %v1566 = vpop.f32.mrb[0].mxu0
    %v1567 = vadd.f32 0.0, %v1566
    %v1568 = vpop.f32.mrb[0].mxu0
    %v1569 = vadd.f32 0.0, %v1568
    %v1570 = vpop.f32.mrb[0].mxu0
    %v1571 = vadd.f32 0.0, %v1570
    %1572 = vdwg.mxu0
    %1573 = vmatprep.subr.bf16.mxu0 %v1512
    %1574 = vmatpush1.bf16.msra.mxu0 %v1509
    %1575 = vmatprep.subr.bf16.mxu0 0
    %1576 = vmatpush1.bf16.msra.mxu0 0
    %1577 = vmatprep.subr.bf16.mxu0 0
    %1578 = vmatpush1.bf16.msra.mxu0 0
    %1579 = vmatprep.subr.bf16.mxu0 0
    %1580 = vmatpush1.bf16.msra.mxu0 0
    %1581 = vmatprep.subr.bf16.mxu0 0
    %1582 = vmatpush1.bf16.msra.mxu0 0
    %1583 = vmatprep.subr.bf16.mxu0 0
    %1584 = vmatpush1.bf16.msra.mxu0 0
    %1585 = vmatprep.subr.bf16.mxu0 0
    %1586 = vmatpush1.bf16.msra.mxu0 0
    %1587 = vmatprep.subr.bf16.mxu0 0
    %1588 = vmatpush1.bf16.msra.mxu0 0
    %1589 = vmatprep.subr.bf16.mxu0 0
    %1590 = vmatpush1.bf16.msra.mxu0 0
    %1591 = vmatprep.subr.bf16.mxu0 0
    %1592 = vmatpush1.bf16.msra.mxu0 0
    %1593 = vmatprep.subr.bf16.mxu0 0
    %1594 = vmatpush1.bf16.msra.mxu0 0
    %1595 = vmatprep.subr.bf16.mxu0 0
    %1596 = vmatpush1.bf16.msra.mxu0 0
    %1597 = vmatprep.subr.bf16.mxu0 0
    %1598 = vmatpush1.bf16.msra.mxu0 0
    %1599 = vmatprep.subr.bf16.mxu0 0
    %1600 = vmatpush1.bf16.msra.mxu0 0
    %1601 = vmatprep.subr.bf16.mxu0 0
    %1602 = vmatpush1.bf16.msra.mxu0 0
    %1603 = vmatprep.subr.bf16.mxu0 0
    %1604 = vmatpush1.bf16.msra.mxu0 0
    %1605 = vmatprep.mubr.bf16.mxu0 0
    %1606 = vmatmul.mubr.bf16.gmra.mrb[0].mxu0 %v1497
    %v1607 = vpop.f32.mrb[0].mxu0
    %v1608 = vadd.f32 0.0, %v1607
    %v1609 = vpop.f32.mrb[0].mxu0
    %v1610 = vadd.f32 0.0, %v1609
    %v1611 = vpop.f32.mrb[0].mxu0
    %v1612 = vadd.f32 0.0, %v1611
    %v1613 = vpop.f32.mrb[0].mxu0
    %v1614 = vadd.f32 0.0, %v1613
    %1615 = vmatprep.mubr.bf16.mxu0 0
    %1616 = vmatmul.mubr.bf16.gmra.mrb[0].mxu0 %v1500
    %v1617 = vpop.f32.mrb[0].mxu0
    %v1618 = vadd.f32 0.0, %v1617
    %v1619 = vpop.f32.mrb[0].mxu0
    %v1620 = vadd.f32 0.0, %v1619
    %v1621 = vpop.f32.mrb[0].mxu0
    %v1622 = vadd.f32 0.0, %v1621
    %v1623 = vpop.f32.mrb[0].mxu0
    %v1624 = vadd.f32 0.0, %v1623
    %1625 = vdwg.mxu0
    %1626 = vmatprep.subr.bf16.mxu0 %v1518
    %1627 = vmatpush1.bf16.msra.mxu0 %v1515
    %1628 = vmatprep.subr.bf16.mxu0 0
    %1629 = vmatpush1.bf16.msra.mxu0 0
    %1630 = vmatprep.subr.bf16.mxu0 0
    %1631 = vmatpush1.bf16.msra.mxu0 0
    %1632 = vmatprep.subr.bf16.mxu0 0
    %1633 = vmatpush1.bf16.msra.mxu0 0
    %1634 = vmatprep.subr.bf16.mxu0 0
    %1635 = vmatpush1.bf16.msra.mxu0 0
    %1636 = vmatprep.subr.bf16.mxu0 0
    %1637 = vmatpush1.bf16.msra.mxu0 0
    %1638 = vmatprep.subr.bf16.mxu0 0
    %1639 = vmatpush1.bf16.msra.mxu0 0
    %1640 = vmatprep.subr.bf16.mxu0 0
    %1641 = vmatpush1.bf16.msra.mxu0 0
    %1642 = vmatprep.subr.bf16.mxu0 0
    %1643 = vmatpush1.bf16.msra.mxu0 0
    %1644 = vmatprep.subr.bf16.mxu0 0
    %1645 = vmatpush1.bf16.msra.mxu0 0
    %1646 = vmatprep.subr.bf16.mxu0 0
    %1647 = vmatpush1.bf16.msra.mxu0 0
    %1648 = vmatprep.subr.bf16.mxu0 0
    %1649 = vmatpush1.bf16.msra.mxu0 0
    %1650 = vmatprep.subr.bf16.mxu0 0
    %1651 = vmatpush1.bf16.msra.mxu0 0
    %1652 = vmatprep.subr.bf16.mxu0 0
    %1653 = vmatpush1.bf16.msra.mxu0 0
    %1654 = vmatprep.subr.bf16.mxu0 0
    %1655 = vmatpush1.bf16.msra.mxu0 0
    %1656 = vmatprep.subr.bf16.mxu0 0
    %1657 = vmatpush1.bf16.msra.mxu0 0
    %1658 = vmatprep.mubr.bf16.mxu0 0
    %1659 = vmatmul.mubr.bf16.gmra.mrb[0].mxu0 %v1497
    %v1660 = vpop.f32.mrb[0].mxu0
    %v1661 = vadd.f32 0.0, %v1660
    %v1662 = vpop.f32.mrb[0].mxu0
    %v1663 = vadd.f32 0.0, %v1662
    %v1664 = vpop.f32.mrb[0].mxu0
    %v1665 = vadd.f32 0.0, %v1664
    %v1666 = vpop.f32.mrb[0].mxu0
    %v1667 = vadd.f32 0.0, %v1666
    %1668 = vmatprep.mubr.bf16.mxu0 0
    %1669 = vmatmul.mubr.bf16.gmra.mrb[0].mxu0 %v1500
    %v1670 = vpop.f32.mrb[0].mxu0
    %v1671 = vadd.f32 0.0, %v1670
    %v1672 = vpop.f32.mrb[0].mxu0
    %v1673 = vadd.f32 0.0, %v1672
    %v1674 = vpop.f32.mrb[0].mxu0
    %v1675 = vadd.f32 0.0, %v1674
    %v1676 = vpop.f32.mrb[0].mxu0
    %v1677 = vadd.f32 0.0, %v1676
    %1678 = vdwg.mxu0
    %v1679 = vadd.f32 %v1436, %v1555
    %v1680 = vadd.f32 %v1437, %v1557
    %v1681 = vadd.f32 %v1438, %v1608
    %v1682 = vadd.f32 %v1439, %v1610
    %v1683 = vadd.f32 %v1440, %v1661
    %v1684 = vadd.f32 %v1441, %v1663
    %v1685 = vadd.f32 %v1442, %v1559
    %v1686 = vadd.f32 %v1443, %v1561
    %v1687 = vadd.f32 %v1444, %v1612
    %v1688 = vadd.f32 %v1445, %v1614
    %v1689 = vadd.f32 %v1446, %v1665
    %v1690 = vadd.f32 %v1447, %v1667
    %v1691 = vadd.f32 %v1448, %v1565
    %v1692 = vadd.f32 %v1449, %v1567
    %v1693 = vadd.f32 %v1450, %v1618
    %v1694 = vadd.f32 %v1451, %v1620
    %v1695 = vadd.f32 %v1452, %v1671
    %v1696 = vadd.f32 %v1453, %v1673
    %v1697 = vadd.f32 %v1454, %v1569
    %v1698 = vadd.f32 %v1455, %v1571
    %v1699 = vadd.f32 %v1456, %v1622
    %v1700 = vadd.f32 %v1457, %v1624
    %v1701 = vadd.f32 %v1458, %v1675
    %v1702 = vadd.f32 %v1459, %v1677
    %s1703 = scalar_lea.vmem %s2, 112
    %v1704 = vld [vmem:[%s1703] sm:$0xf]
    %v1705 = vld [vmem:[%s1703 + $0x4] sm:$0xf]
    %v1706 = vld [vmem:[%s1703 + $0x8] sm:$0xf]
    %v1707 = vld [vmem:[%s1703 + $0xc] sm:$0xf]
    %v1712 = vunpack.c.l.b16 %v1704
    %v1713 = vunpack.c.l.b16 %v1705
    %v1714 = vunpack.c.l.b16 %v1706
    %v1715 = vunpack.c.l.b16 %v1707
    %v1716 = vpack.c.b16 %v1713, %v1712
    %v1717 = vpack.c.b16 %v1715, %v1714
    %1718 = vrot.lane.b32.xlu0 %v63, 91
    %v1719 = vpop.permute.xlu0 %1718
    %1720 = vrot.lane.b32.xlu0 %v64, 91
    %v1721 = vpop.permute.xlu0 %1720
    %1722 = vrot.lane.b32.xlu0 %v65, 91
    %v1723 = vpop.permute.xlu0 %1722
    %1724 = vrot.lane.b32.xlu0 %v66, 91
    %v1725 = vpop.permute.xlu0 %1724
    %1726 = vrot.lane.b32.xlu0 %v67, 91
    %v1727 = vpop.permute.xlu0 %1726
    %1728 = vrot.lane.b32.xlu0 %v68, 91
    %v1729 = vpop.permute.xlu0 %1728
    %1730 = vrot.lane.b32.xlu0 %v53, 91
    %v1731 = vpop.permute.xlu0 %1730
    %vm1732 = vcmask 744448
    %v1733 = vsel %vm1732, %v1719, %v1721
    %v1734 = vsel %vm1732, %v1721, %v1723
    %v1735 = vsel %vm1732, %v1723, %v1725
    %v1736 = vsel %vm1732, %v1725, %v1727
    %v1737 = vsel %vm1732, %v1727, %v1729
    %v1738 = vsel %vm1732, %v1729, %v1731
    %v1740 = vsel %vm110, %v1716, 0
    %v1743 = vsel %vm110, %v1717, 0
    %v1746 = vsel %vm117, %v1733, 0
    %v1749 = vsel %vm117, %v1734, 0
    %v1752 = vsel %vm117, %v1735, 0
    %v1755 = vsel %vm117, %v1736, 0
    %v1758 = vsel %vm117, %v1737, 0
    %v1761 = vsel %vm117, %v1738, 0
    %1763 = vmatprep.subr.bf16.mxu0 %v1749
    %1764 = vmatpush1.bf16.msra.mxu0 %v1746
    %1765 = vmatprep.subr.bf16.mxu0 0
    %1766 = vmatpush1.bf16.msra.mxu0 0
    %1767 = vmatprep.subr.bf16.mxu0 0
    %1768 = vmatpush1.bf16.msra.mxu0 0
    %1769 = vmatprep.subr.bf16.mxu0 0
    %1770 = vmatpush1.bf16.msra.mxu0 0
    %1771 = vmatprep.subr.bf16.mxu0 0
    %1772 = vmatpush1.bf16.msra.mxu0 0
    %1773 = vmatprep.subr.bf16.mxu0 0
    %1774 = vmatpush1.bf16.msra.mxu0 0
    %1775 = vmatprep.subr.bf16.mxu0 0
    %1776 = vmatpush1.bf16.msra.mxu0 0
    %1777 = vmatprep.subr.bf16.mxu0 0
    %1778 = vmatpush1.bf16.msra.mxu0 0
    %1779 = vmatprep.subr.bf16.mxu0 0
    %1780 = vmatpush1.bf16.msra.mxu0 0
    %1781 = vmatprep.subr.bf16.mxu0 0
    %1782 = vmatpush1.bf16.msra.mxu0 0
    %1783 = vmatprep.subr.bf16.mxu0 0
    %1784 = vmatpush1.bf16.msra.mxu0 0
    %1785 = vmatprep.subr.bf16.mxu0 0
    %1786 = vmatpush1.bf16.msra.mxu0 0
    %1787 = vmatprep.subr.bf16.mxu0 0
    %1788 = vmatpush1.bf16.msra.mxu0 0
    %1789 = vmatprep.subr.bf16.mxu0 0
    %1790 = vmatpush1.bf16.msra.mxu0 0
    %1791 = vmatprep.subr.bf16.mxu0 0
    %1792 = vmatpush1.bf16.msra.mxu0 0
    %1793 = vmatprep.subr.bf16.mxu0 0
    %1794 = vmatpush1.bf16.msra.mxu0 0
    %1795 = vmatprep.mubr.bf16.mxu0 0
    %1796 = vmatmul.mubr.bf16.gmra.mrb[0].mxu0 %v1740
    %v1797 = vpop.f32.mrb[0].mxu0
    %v1798 = vadd.f32 0.0, %v1797
    %v1799 = vpop.f32.mrb[0].mxu0
    %v1800 = vadd.f32 0.0, %v1799
    %v1801 = vpop.f32.mrb[0].mxu0
    %v1802 = vadd.f32 0.0, %v1801
    %v1803 = vpop.f32.mrb[0].mxu0
    %v1804 = vadd.f32 0.0, %v1803
    %1805 = vmatprep.mubr.bf16.mxu0 0
    %1806 = vmatmul.mubr.bf16.gmra.mrb[0].mxu0 %v1743
    %v1807 = vpop.f32.mrb[0].mxu0
    %v1808 = vadd.f32 0.0, %v1807
    %v1809 = vpop.f32.mrb[0].mxu0
    %v1810 = vadd.f32 0.0, %v1809
    %v1811 = vpop.f32.mrb[0].mxu0
    %v1812 = vadd.f32 0.0, %v1811
    %v1813 = vpop.f32.mrb[0].mxu0
    %v1814 = vadd.f32 0.0, %v1813
    %1815 = vdwg.mxu0
    %1816 = vmatprep.subr.bf16.mxu0 %v1755
    %1817 = vmatpush1.bf16.msra.mxu0 %v1752
    %1818 = vmatprep.subr.bf16.mxu0 0
    %1819 = vmatpush1.bf16.msra.mxu0 0
    %1820 = vmatprep.subr.bf16.mxu0 0
    %1821 = vmatpush1.bf16.msra.mxu0 0
    %1822 = vmatprep.subr.bf16.mxu0 0
    %1823 = vmatpush1.bf16.msra.mxu0 0
    %1824 = vmatprep.subr.bf16.mxu0 0
    %1825 = vmatpush1.bf16.msra.mxu0 0
    %1826 = vmatprep.subr.bf16.mxu0 0
    %1827 = vmatpush1.bf16.msra.mxu0 0
    %1828 = vmatprep.subr.bf16.mxu0 0
    %1829 = vmatpush1.bf16.msra.mxu0 0
    %1830 = vmatprep.subr.bf16.mxu0 0
    %1831 = vmatpush1.bf16.msra.mxu0 0
    %1832 = vmatprep.subr.bf16.mxu0 0
    %1833 = vmatpush1.bf16.msra.mxu0 0
    %1834 = vmatprep.subr.bf16.mxu0 0
    %1835 = vmatpush1.bf16.msra.mxu0 0
    %1836 = vmatprep.subr.bf16.mxu0 0
    %1837 = vmatpush1.bf16.msra.mxu0 0
    %1838 = vmatprep.subr.bf16.mxu0 0
    %1839 = vmatpush1.bf16.msra.mxu0 0
    %1840 = vmatprep.subr.bf16.mxu0 0
    %1841 = vmatpush1.bf16.msra.mxu0 0
    %1842 = vmatprep.subr.bf16.mxu0 0
    %1843 = vmatpush1.bf16.msra.mxu0 0
    %1844 = vmatprep.subr.bf16.mxu0 0
    %1845 = vmatpush1.bf16.msra.mxu0 0
    %1846 = vmatprep.subr.bf16.mxu0 0
    %1847 = vmatpush1.bf16.msra.mxu0 0
    %1848 = vmatprep.mubr.bf16.mxu0 0
    %1849 = vmatmul.mubr.bf16.gmra.mrb[0].mxu0 %v1740
    %v1850 = vpop.f32.mrb[0].mxu0
    %v1851 = vadd.f32 0.0, %v1850
    %v1852 = vpop.f32.mrb[0].mxu0
    %v1853 = vadd.f32 0.0, %v1852
    %v1854 = vpop.f32.mrb[0].mxu0
    %v1855 = vadd.f32 0.0, %v1854
    %v1856 = vpop.f32.mrb[0].mxu0
    %v1857 = vadd.f32 0.0, %v1856
    %1858 = vmatprep.mubr.bf16.mxu0 0
    %1859 = vmatmul.mubr.bf16.gmra.mrb[0].mxu0 %v1743
    %v1860 = vpop.f32.mrb[0].mxu0
    %v1861 = vadd.f32 0.0, %v1860
    %v1862 = vpop.f32.mrb[0].mxu0
    %v1863 = vadd.f32 0.0, %v1862
    %v1864 = vpop.f32.mrb[0].mxu0
    %v1865 = vadd.f32 0.0, %v1864
    %v1866 = vpop.f32.mrb[0].mxu0
    %v1867 = vadd.f32 0.0, %v1866
    %1868 = vdwg.mxu0
    %1869 = vmatprep.subr.bf16.mxu0 %v1761
    %1870 = vmatpush1.bf16.msra.mxu0 %v1758
    %1871 = vmatprep.subr.bf16.mxu0 0
    %1872 = vmatpush1.bf16.msra.mxu0 0
    %1873 = vmatprep.subr.bf16.mxu0 0
    %1874 = vmatpush1.bf16.msra.mxu0 0
    %1875 = vmatprep.subr.bf16.mxu0 0
    %1876 = vmatpush1.bf16.msra.mxu0 0
    %1877 = vmatprep.subr.bf16.mxu0 0
    %1878 = vmatpush1.bf16.msra.mxu0 0
    %1879 = vmatprep.subr.bf16.mxu0 0
    %1880 = vmatpush1.bf16.msra.mxu0 0
    %1881 = vmatprep.subr.bf16.mxu0 0
    %1882 = vmatpush1.bf16.msra.mxu0 0
    %1883 = vmatprep.subr.bf16.mxu0 0
    %1884 = vmatpush1.bf16.msra.mxu0 0
    %1885 = vmatprep.subr.bf16.mxu0 0
    %1886 = vmatpush1.bf16.msra.mxu0 0
    %1887 = vmatprep.subr.bf16.mxu0 0
    %1888 = vmatpush1.bf16.msra.mxu0 0
    %1889 = vmatprep.subr.bf16.mxu0 0
    %1890 = vmatpush1.bf16.msra.mxu0 0
    %1891 = vmatprep.subr.bf16.mxu0 0
    %1892 = vmatpush1.bf16.msra.mxu0 0
    %1893 = vmatprep.subr.bf16.mxu0 0
    %1894 = vmatpush1.bf16.msra.mxu0 0
    %1895 = vmatprep.subr.bf16.mxu0 0
    %1896 = vmatpush1.bf16.msra.mxu0 0
    %1897 = vmatprep.subr.bf16.mxu0 0
    %1898 = vmatpush1.bf16.msra.mxu0 0
    %1899 = vmatprep.subr.bf16.mxu0 0
    %1900 = vmatpush1.bf16.msra.mxu0 0
    %1901 = vmatprep.mubr.bf16.mxu0 0
    %1902 = vmatmul.mubr.bf16.gmra.mrb[0].mxu0 %v1740
    %v1903 = vpop.f32.mrb[0].mxu0
    %v1904 = vadd.f32 0.0, %v1903
    %v1905 = vpop.f32.mrb[0].mxu0
    %v1906 = vadd.f32 0.0, %v1905
    %v1907 = vpop.f32.mrb[0].mxu0
    %v1908 = vadd.f32 0.0, %v1907
    %v1909 = vpop.f32.mrb[0].mxu0
    %v1910 = vadd.f32 0.0, %v1909
    %1911 = vmatprep.mubr.bf16.mxu0 0
    %1912 = vmatmul.mubr.bf16.gmra.mrb[0].mxu0 %v1743
    %v1913 = vpop.f32.mrb[0].mxu0
    %v1914 = vadd.f32 0.0, %v1913
    %v1915 = vpop.f32.mrb[0].mxu0
    %v1916 = vadd.f32 0.0, %v1915
    %v1917 = vpop.f32.mrb[0].mxu0
    %v1918 = vadd.f32 0.0, %v1917
    %v1919 = vpop.f32.mrb[0].mxu0
    %v1920 = vadd.f32 0.0, %v1919
    %1921 = vdwg.mxu0
    %v1922 = vadd.f32 %v1679, %v1798
    %v1923 = vadd.f32 %v1680, %v1800
    %v1924 = vadd.f32 %v1681, %v1851
    %v1925 = vadd.f32 %v1682, %v1853
    %v1926 = vadd.f32 %v1683, %v1904
    %v1927 = vadd.f32 %v1684, %v1906
    %v1928 = vadd.f32 %v1685, %v1802
    %v1929 = vadd.f32 %v1686, %v1804
    %v1930 = vadd.f32 %v1687, %v1855
    %v1931 = vadd.f32 %v1688, %v1857
    %v1932 = vadd.f32 %v1689, %v1908
    %v1933 = vadd.f32 %v1690, %v1910
    %v1934 = vadd.f32 %v1691, %v1808
    %v1935 = vadd.f32 %v1692, %v1810
    %v1936 = vadd.f32 %v1693, %v1861
    %v1937 = vadd.f32 %v1694, %v1863
    %v1938 = vadd.f32 %v1695, %v1914
    %v1939 = vadd.f32 %v1696, %v1916
    %v1940 = vadd.f32 %v1697, %v1812
    %v1941 = vadd.f32 %v1698, %v1814
    %v1942 = vadd.f32 %v1699, %v1865
    %v1943 = vadd.f32 %v1700, %v1867
    %v1944 = vadd.f32 %v1701, %v1918
    %v1945 = vadd.f32 %v1702, %v1920
    %s1946 = scalar_lea.vmem %s2, 128
    %v1947 = vld [vmem:[%s1946] sm:$0xf]
    %v1948 = vld [vmem:[%s1946 + $0x4] sm:$0xf]
    %v1949 = vld [vmem:[%s1946 + $0x8] sm:$0xf]
    %v1950 = vld [vmem:[%s1946 + $0xc] sm:$0xf]
    %v1955 = vunpack.c.l.b16 %v1947
    %v1956 = vunpack.c.l.b16 %v1948
    %v1957 = vunpack.c.l.b16 %v1949
    %v1958 = vunpack.c.l.b16 %v1950
    %v1959 = vpack.c.b16 %v1956, %v1955
    %v1960 = vpack.c.b16 %v1958, %v1957
    %1961 = vrot.lane.b32.xlu0 %v63, 90
    %v1962 = vpop.permute.xlu0 %1961
    %1963 = vrot.lane.b32.xlu0 %v64, 90
    %v1964 = vpop.permute.xlu0 %1963
    %1965 = vrot.lane.b32.xlu0 %v65, 90
    %v1966 = vpop.permute.xlu0 %1965
    %1967 = vrot.lane.b32.xlu0 %v66, 90
    %v1968 = vpop.permute.xlu0 %1967
    %1969 = vrot.lane.b32.xlu0 %v67, 90
    %v1970 = vpop.permute.xlu0 %1969
    %1971 = vrot.lane.b32.xlu0 %v68, 90
    %v1972 = vpop.permute.xlu0 %1971
    %1973 = vrot.lane.b32.xlu0 %v53, 90
    %v1974 = vpop.permute.xlu0 %1973
    %vm1975 = vcmask 736256
    %v1976 = vsel %vm1975, %v1962, %v1964
    %v1977 = vsel %vm1975, %v1964, %v1966
    %v1978 = vsel %vm1975, %v1966, %v1968
    %v1979 = vsel %vm1975, %v1968, %v1970
    %v1980 = vsel %vm1975, %v1970, %v1972
    %v1981 = vsel %vm1975, %v1972, %v1974
    %v1983 = vsel %vm110, %v1959, 0
    %v1986 = vsel %vm110, %v1960, 0
    %v1989 = vsel %vm117, %v1976, 0
    %v1992 = vsel %vm117, %v1977, 0
    %v1995 = vsel %vm117, %v1978, 0
    %v1998 = vsel %vm117, %v1979, 0
    %v2001 = vsel %vm117, %v1980, 0
    %v2004 = vsel %vm117, %v1981, 0
    %2006 = vmatprep.subr.bf16.mxu0 %v1992
    %2007 = vmatpush1.bf16.msra.mxu0 %v1989
    %2008 = vmatprep.subr.bf16.mxu0 0
    %2009 = vmatpush1.bf16.msra.mxu0 0
    %2010 = vmatprep.subr.bf16.mxu0 0
    %2011 = vmatpush1.bf16.msra.mxu0 0
    %2012 = vmatprep.subr.bf16.mxu0 0
    %2013 = vmatpush1.bf16.msra.mxu0 0
    %2014 = vmatprep.subr.bf16.mxu0 0
    %2015 = vmatpush1.bf16.msra.mxu0 0
    %2016 = vmatprep.subr.bf16.mxu0 0
    %2017 = vmatpush1.bf16.msra.mxu0 0
    %2018 = vmatprep.subr.bf16.mxu0 0
    %2019 = vmatpush1.bf16.msra.mxu0 0
    %2020 = vmatprep.subr.bf16.mxu0 0
    %2021 = vmatpush1.bf16.msra.mxu0 0
    %2022 = vmatprep.subr.bf16.mxu0 0
    %2023 = vmatpush1.bf16.msra.mxu0 0
    %2024 = vmatprep.subr.bf16.mxu0 0
    %2025 = vmatpush1.bf16.msra.mxu0 0
    %2026 = vmatprep.subr.bf16.mxu0 0
    %2027 = vmatpush1.bf16.msra.mxu0 0
    %2028 = vmatprep.subr.bf16.mxu0 0
    %2029 = vmatpush1.bf16.msra.mxu0 0
    %2030 = vmatprep.subr.bf16.mxu0 0
    %2031 = vmatpush1.bf16.msra.mxu0 0
    %2032 = vmatprep.subr.bf16.mxu0 0
    %2033 = vmatpush1.bf16.msra.mxu0 0
    %2034 = vmatprep.subr.bf16.mxu0 0
    %2035 = vmatpush1.bf16.msra.mxu0 0
    %2036 = vmatprep.subr.bf16.mxu0 0
    %2037 = vmatpush1.bf16.msra.mxu0 0
    %2038 = vmatprep.mubr.bf16.mxu0 0
    %2039 = vmatmul.mubr.bf16.gmra.mrb[0].mxu0 %v1983
    %v2040 = vpop.f32.mrb[0].mxu0
    %v2041 = vadd.f32 0.0, %v2040
    %v2042 = vpop.f32.mrb[0].mxu0
    %v2043 = vadd.f32 0.0, %v2042
    %v2044 = vpop.f32.mrb[0].mxu0
    %v2045 = vadd.f32 0.0, %v2044
    %v2046 = vpop.f32.mrb[0].mxu0
    %v2047 = vadd.f32 0.0, %v2046
    %2048 = vmatprep.mubr.bf16.mxu0 0
    %2049 = vmatmul.mubr.bf16.gmra.mrb[0].mxu0 %v1986
    %v2050 = vpop.f32.mrb[0].mxu0
    %v2051 = vadd.f32 0.0, %v2050
    %v2052 = vpop.f32.mrb[0].mxu0
    %v2053 = vadd.f32 0.0, %v2052
    %v2054 = vpop.f32.mrb[0].mxu0
    %v2055 = vadd.f32 0.0, %v2054
    %v2056 = vpop.f32.mrb[0].mxu0
    %v2057 = vadd.f32 0.0, %v2056
    %2058 = vdwg.mxu0
    %2059 = vmatprep.subr.bf16.mxu0 %v1998
    %2060 = vmatpush1.bf16.msra.mxu0 %v1995
    %2061 = vmatprep.subr.bf16.mxu0 0
    %2062 = vmatpush1.bf16.msra.mxu0 0
    %2063 = vmatprep.subr.bf16.mxu0 0
    %2064 = vmatpush1.bf16.msra.mxu0 0
    %2065 = vmatprep.subr.bf16.mxu0 0
    %2066 = vmatpush1.bf16.msra.mxu0 0
    %2067 = vmatprep.subr.bf16.mxu0 0
    %2068 = vmatpush1.bf16.msra.mxu0 0
    %2069 = vmatprep.subr.bf16.mxu0 0
    %2070 = vmatpush1.bf16.msra.mxu0 0
    %2071 = vmatprep.subr.bf16.mxu0 0
    %2072 = vmatpush1.bf16.msra.mxu0 0
    %2073 = vmatprep.subr.bf16.mxu0 0
    %2074 = vmatpush1.bf16.msra.mxu0 0
    %2075 = vmatprep.subr.bf16.mxu0 0
    %2076 = vmatpush1.bf16.msra.mxu0 0
    %2077 = vmatprep.subr.bf16.mxu0 0
    %2078 = vmatpush1.bf16.msra.mxu0 0
    %2079 = vmatprep.subr.bf16.mxu0 0
    %2080 = vmatpush1.bf16.msra.mxu0 0
    %2081 = vmatprep.subr.bf16.mxu0 0
    %2082 = vmatpush1.bf16.msra.mxu0 0
    %2083 = vmatprep.subr.bf16.mxu0 0
    %2084 = vmatpush1.bf16.msra.mxu0 0
    %2085 = vmatprep.subr.bf16.mxu0 0
    %2086 = vmatpush1.bf16.msra.mxu0 0
    %2087 = vmatprep.subr.bf16.mxu0 0
    %2088 = vmatpush1.bf16.msra.mxu0 0
    %2089 = vmatprep.subr.bf16.mxu0 0
    %2090 = vmatpush1.bf16.msra.mxu0 0
    %2091 = vmatprep.mubr.bf16.mxu0 0
    %2092 = vmatmul.mubr.bf16.gmra.mrb[0].mxu0 %v1983
    %v2093 = vpop.f32.mrb[0].mxu0
    %v2094 = vadd.f32 0.0, %v2093
    %v2095 = vpop.f32.mrb[0].mxu0
    %v2096 = vadd.f32 0.0, %v2095
    %v2097 = vpop.f32.mrb[0].mxu0
    %v2098 = vadd.f32 0.0, %v2097
    %v2099 = vpop.f32.mrb[0].mxu0
    %v2100 = vadd.f32 0.0, %v2099
    %2101 = vmatprep.mubr.bf16.mxu0 0
    %2102 = vmatmul.mubr.bf16.gmra.mrb[0].mxu0 %v1986
    %v2103 = vpop.f32.mrb[0].mxu0
    %v2104 = vadd.f32 0.0, %v2103
    %v2105 = vpop.f32.mrb[0].mxu0
    %v2106 = vadd.f32 0.0, %v2105
    %v2107 = vpop.f32.mrb[0].mxu0
    %v2108 = vadd.f32 0.0, %v2107
    %v2109 = vpop.f32.mrb[0].mxu0
    %v2110 = vadd.f32 0.0, %v2109
    %2111 = vdwg.mxu0
    %2112 = vmatprep.subr.bf16.mxu0 %v2004
    %2113 = vmatpush1.bf16.msra.mxu0 %v2001
    %2114 = vmatprep.subr.bf16.mxu0 0
    %2115 = vmatpush1.bf16.msra.mxu0 0
    %2116 = vmatprep.subr.bf16.mxu0 0
    %2117 = vmatpush1.bf16.msra.mxu0 0
    %2118 = vmatprep.subr.bf16.mxu0 0
    %2119 = vmatpush1.bf16.msra.mxu0 0
    %2120 = vmatprep.subr.bf16.mxu0 0
    %2121 = vmatpush1.bf16.msra.mxu0 0
    %2122 = vmatprep.subr.bf16.mxu0 0
    %2123 = vmatpush1.bf16.msra.mxu0 0
    %2124 = vmatprep.subr.bf16.mxu0 0
    %2125 = vmatpush1.bf16.msra.mxu0 0
    %2126 = vmatprep.subr.bf16.mxu0 0
    %2127 = vmatpush1.bf16.msra.mxu0 0
    %2128 = vmatprep.subr.bf16.mxu0 0
    %2129 = vmatpush1.bf16.msra.mxu0 0
    %2130 = vmatprep.subr.bf16.mxu0 0
    %2131 = vmatpush1.bf16.msra.mxu0 0
    %2132 = vmatprep.subr.bf16.mxu0 0
    %2133 = vmatpush1.bf16.msra.mxu0 0
    %2134 = vmatprep.subr.bf16.mxu0 0
    %2135 = vmatpush1.bf16.msra.mxu0 0
    %2136 = vmatprep.subr.bf16.mxu0 0
    %2137 = vmatpush1.bf16.msra.mxu0 0
    %2138 = vmatprep.subr.bf16.mxu0 0
    %2139 = vmatpush1.bf16.msra.mxu0 0
    %2140 = vmatprep.subr.bf16.mxu0 0
    %2141 = vmatpush1.bf16.msra.mxu0 0
    %2142 = vmatprep.subr.bf16.mxu0 0
    %2143 = vmatpush1.bf16.msra.mxu0 0
    %2144 = vmatprep.mubr.bf16.mxu0 0
    %2145 = vmatmul.mubr.bf16.gmra.mrb[0].mxu0 %v1983
    %v2146 = vpop.f32.mrb[0].mxu0
    %v2147 = vadd.f32 0.0, %v2146
    %v2148 = vpop.f32.mrb[0].mxu0
    %v2149 = vadd.f32 0.0, %v2148
    %v2150 = vpop.f32.mrb[0].mxu0
    %v2151 = vadd.f32 0.0, %v2150
    %v2152 = vpop.f32.mrb[0].mxu0
    %v2153 = vadd.f32 0.0, %v2152
    %2154 = vmatprep.mubr.bf16.mxu0 0
    %2155 = vmatmul.mubr.bf16.gmra.mrb[0].mxu0 %v1986
    %v2156 = vpop.f32.mrb[0].mxu0
    %v2157 = vadd.f32 0.0, %v2156
    %v2158 = vpop.f32.mrb[0].mxu0
    %v2159 = vadd.f32 0.0, %v2158
    %v2160 = vpop.f32.mrb[0].mxu0
    %v2161 = vadd.f32 0.0, %v2160
    %v2162 = vpop.f32.mrb[0].mxu0
    %v2163 = vadd.f32 0.0, %v2162
    %2164 = vdwg.mxu0
    %v2165 = vadd.f32 %v1922, %v2041
    %v2166 = vadd.f32 %v1923, %v2043
    %v2167 = vadd.f32 %v1924, %v2094
    %v2168 = vadd.f32 %v1925, %v2096
    %v2169 = vadd.f32 %v1926, %v2147
    %v2170 = vadd.f32 %v1927, %v2149
    %v2171 = vadd.f32 %v1928, %v2045
    %v2172 = vadd.f32 %v1929, %v2047
    %v2173 = vadd.f32 %v1930, %v2098
    %v2174 = vadd.f32 %v1931, %v2100
    %v2175 = vadd.f32 %v1932, %v2151
    %v2176 = vadd.f32 %v1933, %v2153
    %v2177 = vadd.f32 %v1934, %v2051
    %v2178 = vadd.f32 %v1935, %v2053
    %v2179 = vadd.f32 %v1936, %v2104
    %v2180 = vadd.f32 %v1937, %v2106
    %v2181 = vadd.f32 %v1938, %v2157
    %v2182 = vadd.f32 %v1939, %v2159
    %v2183 = vadd.f32 %v1940, %v2055
    %v2184 = vadd.f32 %v1941, %v2057
    %v2185 = vadd.f32 %v1942, %v2108
    %v2186 = vadd.f32 %v1943, %v2110
    %v2187 = vadd.f32 %v1944, %v2161
    %v2188 = vadd.f32 %v1945, %v2163
    %v2189 = vld [vmem:[%s3] sm:$0xff]
    %v2190 = vld [vmem:[%s3 + $0x8] sm:$0xff]
    %v2191 = vld [vmem:[%s3 + $0x10] sm:$0xff]
    %v2192 = vld [vmem:[%s3 + $0x18] sm:$0xff]
    %2194 = vset.pattern.permute.xlu0 0
    %2195 = vperm.xlu0 %2194, %v2189
    %v2196 = vpop.permute.xlu0 %2195
    %2199 = vset.pattern.permute.xlu0 0
    %2200 = vperm.xlu0 %2199, %v2190
    %v2201 = vpop.permute.xlu0 %2200
    %2204 = vset.pattern.permute.xlu0 0
    %2205 = vperm.xlu0 %2204, %v2191
    %v2206 = vpop.permute.xlu0 %2205
    %2209 = vset.pattern.permute.xlu0 0
    %2210 = vperm.xlu0 %2209, %v2192
    %v2211 = vpop.permute.xlu0 %2210
    %v2213 = vadd.f32 %v2165, %v2196
    %v2214 = vadd.f32 %v2166, %v2196
    %v2215 = vadd.f32 %v2167, %v2196
    %v2216 = vadd.f32 %v2168, %v2196
    %v2217 = vadd.f32 %v2169, %v2196
    %v2218 = vadd.f32 %v2170, %v2196
    %v2219 = vadd.f32 %v2171, %v2201
    %v2220 = vadd.f32 %v2172, %v2201
    %v2221 = vadd.f32 %v2173, %v2201
    %v2222 = vadd.f32 %v2174, %v2201
    %v2223 = vadd.f32 %v2175, %v2201
    %v2224 = vadd.f32 %v2176, %v2201
    %v2225 = vadd.f32 %v2177, %v2206
    %v2226 = vadd.f32 %v2178, %v2206
    %v2227 = vadd.f32 %v2179, %v2206
    %v2228 = vadd.f32 %v2180, %v2206
    %v2229 = vadd.f32 %v2181, %v2206
    %v2230 = vadd.f32 %v2182, %v2206
    %v2231 = vadd.f32 %v2183, %v2211
    %v2232 = vadd.f32 %v2184, %v2211
    %v2233 = vadd.f32 %v2185, %v2211
    %v2234 = vadd.f32 %v2186, %v2211
    %v2235 = vadd.f32 %v2187, %v2211
    %v2236 = vadd.f32 %v2188, %v2211
    %v2237 = vmul.f32 %v2213, 0.5
    %v2238 = vmul.f32 %v2214, 0.5
    %v2239 = vmul.f32 %v2215, 0.5
    %v2240 = vmul.f32 %v2216, 0.5
    %v2241 = vmul.f32 %v2217, 0.5
    %v2242 = vmul.f32 %v2218, 0.5
    %v2243 = vmul.f32 %v2219, 0.5
    %v2244 = vmul.f32 %v2220, 0.5
    %v2245 = vmul.f32 %v2221, 0.5
    %v2246 = vmul.f32 %v2222, 0.5
    %v2247 = vmul.f32 %v2223, 0.5
    %v2248 = vmul.f32 %v2224, 0.5
    %v2249 = vmul.f32 %v2225, 0.5
    %v2250 = vmul.f32 %v2226, 0.5
    %v2251 = vmul.f32 %v2227, 0.5
    %v2252 = vmul.f32 %v2228, 0.5
    %v2253 = vmul.f32 %v2229, 0.5
    %v2254 = vmul.f32 %v2230, 0.5
    %v2255 = vmul.f32 %v2231, 0.5
    %v2256 = vmul.f32 %v2232, 0.5
    %v2257 = vmul.f32 %v2233, 0.5
    %v2258 = vmul.f32 %v2234, 0.5
    %v2259 = vmul.f32 %v2235, 0.5
    %v2260 = vmul.f32 %v2236, 0.5
    %v2261 = vmul.f32 %v2213, 0.70710677
    %v2262 = vmul.f32 %v2214, 0.70710677
    %v2263 = vmul.f32 %v2215, 0.70710677
    %v2264 = vmul.f32 %v2216, 0.70710677
    %v2265 = vmul.f32 %v2217, 0.70710677
    %v2266 = vmul.f32 %v2218, 0.70710677
    %v2267 = vmul.f32 %v2219, 0.70710677
    %v2268 = vmul.f32 %v2220, 0.70710677
    %v2269 = vmul.f32 %v2221, 0.70710677
    %v2270 = vmul.f32 %v2222, 0.70710677
    %v2271 = vmul.f32 %v2223, 0.70710677
    %v2272 = vmul.f32 %v2224, 0.70710677
    %v2273 = vmul.f32 %v2225, 0.70710677
    %v2274 = vmul.f32 %v2226, 0.70710677
    %v2275 = vmul.f32 %v2227, 0.70710677
    %v2276 = vmul.f32 %v2228, 0.70710677
    %v2277 = vmul.f32 %v2229, 0.70710677
    %v2278 = vmul.f32 %v2230, 0.70710677
    %v2279 = vmul.f32 %v2231, 0.70710677
    %v2280 = vmul.f32 %v2232, 0.70710677
    %v2281 = vmul.f32 %v2233, 0.70710677
    %v2282 = vmul.f32 %v2234, 0.70710677
    %v2283 = vmul.f32 %v2235, 0.70710677
    %v2284 = vmul.f32 %v2236, 0.70710677
    %v2285 = verf.f32.pop %v2261
    %v2286 = verf.f32.pop %v2262
    %v2287 = verf.f32.pop %v2263
    %v2288 = verf.f32.pop %v2264
    %v2289 = verf.f32.pop %v2265
    %v2290 = verf.f32.pop %v2266
    %v2291 = verf.f32.pop %v2267
    %v2292 = verf.f32.pop %v2268
    %v2293 = verf.f32.pop %v2269
    %v2294 = verf.f32.pop %v2270
    %v2295 = verf.f32.pop %v2271
    %v2296 = verf.f32.pop %v2272
    %v2297 = verf.f32.pop %v2273
    %v2298 = verf.f32.pop %v2274
    %v2299 = verf.f32.pop %v2275
    %v2300 = verf.f32.pop %v2276
    %v2301 = verf.f32.pop %v2277
    %v2302 = verf.f32.pop %v2278
    %v2303 = verf.f32.pop %v2279
    %v2304 = verf.f32.pop %v2280
    %v2305 = verf.f32.pop %v2281
    %v2306 = verf.f32.pop %v2282
    %v2307 = verf.f32.pop %v2283
    %v2308 = verf.f32.pop %v2284
    %v2309 = vadd.f32 %v2285, 1.0
    %v2310 = vadd.f32 %v2286, 1.0
    %v2311 = vadd.f32 %v2287, 1.0
    %v2312 = vadd.f32 %v2288, 1.0
    %v2313 = vadd.f32 %v2289, 1.0
    %v2314 = vadd.f32 %v2290, 1.0
    %v2315 = vadd.f32 %v2291, 1.0
    %v2316 = vadd.f32 %v2292, 1.0
    %v2317 = vadd.f32 %v2293, 1.0
    %v2318 = vadd.f32 %v2294, 1.0
    %v2319 = vadd.f32 %v2295, 1.0
    %v2320 = vadd.f32 %v2296, 1.0
    %v2321 = vadd.f32 %v2297, 1.0
    %v2322 = vadd.f32 %v2298, 1.0
    %v2323 = vadd.f32 %v2299, 1.0
    %v2324 = vadd.f32 %v2300, 1.0
    %v2325 = vadd.f32 %v2301, 1.0
    %v2326 = vadd.f32 %v2302, 1.0
    %v2327 = vadd.f32 %v2303, 1.0
    %v2328 = vadd.f32 %v2304, 1.0
    %v2329 = vadd.f32 %v2305, 1.0
    %v2330 = vadd.f32 %v2306, 1.0
    %v2331 = vadd.f32 %v2307, 1.0
    %v2332 = vadd.f32 %v2308, 1.0
    %v2333 = vmul.f32 %v2237, %v2309
    %v2334 = vmul.f32 %v2238, %v2310
    %v2335 = vmul.f32 %v2239, %v2311
    %v2336 = vmul.f32 %v2240, %v2312
    %v2337 = vmul.f32 %v2241, %v2313
    %v2338 = vmul.f32 %v2242, %v2314
    %v2339 = vmul.f32 %v2243, %v2315
    %v2340 = vmul.f32 %v2244, %v2316
    %v2341 = vmul.f32 %v2245, %v2317
    %v2342 = vmul.f32 %v2246, %v2318
    %v2343 = vmul.f32 %v2247, %v2319
    %v2344 = vmul.f32 %v2248, %v2320
    %v2345 = vmul.f32 %v2249, %v2321
    %v2346 = vmul.f32 %v2250, %v2322
    %v2347 = vmul.f32 %v2251, %v2323
    %v2348 = vmul.f32 %v2252, %v2324
    %v2349 = vmul.f32 %v2253, %v2325
    %v2350 = vmul.f32 %v2254, %v2326
    %v2351 = vmul.f32 %v2255, %v2327
    %v2352 = vmul.f32 %v2256, %v2328
    %v2353 = vmul.f32 %v2257, %v2329
    %v2354 = vmul.f32 %v2258, %v2330
    %v2355 = vmul.f32 %v2259, %v2331
    %v2356 = vmul.f32 %v2260, %v2332
    %v2357 = vld [vmem:[%s4] sm:$0xf]
    %v2358 = vpack.c.bf16 %v2339, %v2333
    %v2359 = vpack.c.bf16 %v2340, %v2334
    %v2360 = vpack.c.bf16 %v2341, %v2335
    %v2361 = vpack.c.bf16 %v2342, %v2336
    %v2362 = vpack.c.bf16 %v2343, %v2337
    %v2363 = vpack.c.bf16 %v2344, %v2338
    %v2364 = vpack.c.bf16 %v2351, %v2345
    %v2365 = vpack.c.bf16 %v2352, %v2346
    %v2366 = vpack.c.bf16 %v2353, %v2347
    %v2367 = vpack.c.bf16 %v2354, %v2348
    %v2368 = vpack.c.bf16 %v2355, %v2349
    %v2369 = vpack.c.bf16 %v2356, %v2350
    %vm2370 = vcmask 261120
    %v2372 = vsel %vm2370, %v2357, 0
    %2374 = vmatprep.subr.bf16.mxu0 %v2359
    %2375 = vmatpush1.bf16.msra.mxu0 %v2358
    %2376 = vmatprep.subr.bf16.mxu0 %v2365
    %2377 = vmatpush1.bf16.msra.mxu0 %v2364
    %2378 = vmatprep.subr.bf16.mxu0 0
    %2379 = vmatpush1.bf16.msra.mxu0 0
    %2380 = vmatprep.subr.bf16.mxu0 0
    %2381 = vmatpush1.bf16.msra.mxu0 0
    %2382 = vmatprep.subr.bf16.mxu0 0
    %2383 = vmatpush1.bf16.msra.mxu0 0
    %2384 = vmatprep.subr.bf16.mxu0 0
    %2385 = vmatpush1.bf16.msra.mxu0 0
    %2386 = vmatprep.subr.bf16.mxu0 0
    %2387 = vmatpush1.bf16.msra.mxu0 0
    %2388 = vmatprep.subr.bf16.mxu0 0
    %2389 = vmatpush1.bf16.msra.mxu0 0
    %2390 = vmatprep.subr.bf16.mxu0 0
    %2391 = vmatpush1.bf16.msra.mxu0 0
    %2392 = vmatprep.subr.bf16.mxu0 0
    %2393 = vmatpush1.bf16.msra.mxu0 0
    %2394 = vmatprep.subr.bf16.mxu0 0
    %2395 = vmatpush1.bf16.msra.mxu0 0
    %2396 = vmatprep.subr.bf16.mxu0 0
    %2397 = vmatpush1.bf16.msra.mxu0 0
    %2398 = vmatprep.subr.bf16.mxu0 0
    %2399 = vmatpush1.bf16.msra.mxu0 0
    %2400 = vmatprep.subr.bf16.mxu0 0
    %2401 = vmatpush1.bf16.msra.mxu0 0
    %2402 = vmatprep.subr.bf16.mxu0 0
    %2403 = vmatpush1.bf16.msra.mxu0 0
    %2404 = vmatprep.subr.bf16.mxu0 0
    %2405 = vmatpush1.bf16.msra.mxu0 0
    %2406 = vmatprep.mubr.bf16.mxu0 0
    %2407 = vmatmul.mubr.bf16.gmra.mrb[0].mxu0 %v2372
    %v2408 = vpop.f32.mrb[0].mxu0
    %v2409 = vadd.f32 0.0, %v2408
    %v2410 = vpop.f32.mrb[0].mxu0
    %v2411 = vadd.f32 0.0, %v2410
    %v2412 = vpop.f32.mrb[0].mxu0
    %v2413 = vpop.f32.mrb[0].mxu0
    %2414 = vdwg.mxu0
    %2415 = vmatprep.subr.bf16.mxu0 %v2361
    %2416 = vmatpush1.bf16.msra.mxu0 %v2360
    %2417 = vmatprep.subr.bf16.mxu0 %v2367
    %2418 = vmatpush1.bf16.msra.mxu0 %v2366
    %2419 = vmatprep.subr.bf16.mxu0 0
    %2420 = vmatpush1.bf16.msra.mxu0 0
    %2421 = vmatprep.subr.bf16.mxu0 0
    %2422 = vmatpush1.bf16.msra.mxu0 0
    %2423 = vmatprep.subr.bf16.mxu0 0
    %2424 = vmatpush1.bf16.msra.mxu0 0
    %2425 = vmatprep.subr.bf16.mxu0 0
    %2426 = vmatpush1.bf16.msra.mxu0 0
    %2427 = vmatprep.subr.bf16.mxu0 0
    %2428 = vmatpush1.bf16.msra.mxu0 0
    %2429 = vmatprep.subr.bf16.mxu0 0
    %2430 = vmatpush1.bf16.msra.mxu0 0
    %2431 = vmatprep.subr.bf16.mxu0 0
    %2432 = vmatpush1.bf16.msra.mxu0 0
    %2433 = vmatprep.subr.bf16.mxu0 0
    %2434 = vmatpush1.bf16.msra.mxu0 0
    %2435 = vmatprep.subr.bf16.mxu0 0
    %2436 = vmatpush1.bf16.msra.mxu0 0
    %2437 = vmatprep.subr.bf16.mxu0 0
    %2438 = vmatpush1.bf16.msra.mxu0 0
    %2439 = vmatprep.subr.bf16.mxu0 0
    %2440 = vmatpush1.bf16.msra.mxu0 0
    %2441 = vmatprep.subr.bf16.mxu0 0
    %2442 = vmatpush1.bf16.msra.mxu0 0
    %2443 = vmatprep.subr.bf16.mxu0 0
    %2444 = vmatpush1.bf16.msra.mxu0 0
    %2445 = vmatprep.subr.bf16.mxu0 0
    %2446 = vmatpush1.bf16.msra.mxu0 0
    %2447 = vmatprep.mubr.bf16.mxu0 0
    %2448 = vmatmul.mubr.bf16.gmra.mrb[0].mxu0 %v2372
    %v2449 = vpop.f32.mrb[0].mxu0
    %v2450 = vadd.f32 0.0, %v2449
    %v2451 = vpop.f32.mrb[0].mxu0
    %v2452 = vadd.f32 0.0, %v2451
    %v2453 = vpop.f32.mrb[0].mxu0
    %v2454 = vpop.f32.mrb[0].mxu0
    %2455 = vdwg.mxu0
    %2456 = vmatprep.subr.bf16.mxu0 %v2363
    %2457 = vmatpush1.bf16.msra.mxu0 %v2362
    %2458 = vmatprep.subr.bf16.mxu0 %v2369
    %2459 = vmatpush1.bf16.msra.mxu0 %v2368
    %2460 = vmatprep.subr.bf16.mxu0 0
    %2461 = vmatpush1.bf16.msra.mxu0 0
    %2462 = vmatprep.subr.bf16.mxu0 0
    %2463 = vmatpush1.bf16.msra.mxu0 0
    %2464 = vmatprep.subr.bf16.mxu0 0
    %2465 = vmatpush1.bf16.msra.mxu0 0
    %2466 = vmatprep.subr.bf16.mxu0 0
    %2467 = vmatpush1.bf16.msra.mxu0 0
    %2468 = vmatprep.subr.bf16.mxu0 0
    %2469 = vmatpush1.bf16.msra.mxu0 0
    %2470 = vmatprep.subr.bf16.mxu0 0
    %2471 = vmatpush1.bf16.msra.mxu0 0
    %2472 = vmatprep.subr.bf16.mxu0 0
    %2473 = vmatpush1.bf16.msra.mxu0 0
    %2474 = vmatprep.subr.bf16.mxu0 0
    %2475 = vmatpush1.bf16.msra.mxu0 0
    %2476 = vmatprep.subr.bf16.mxu0 0
    %2477 = vmatpush1.bf16.msra.mxu0 0
    %2478 = vmatprep.subr.bf16.mxu0 0
    %2479 = vmatpush1.bf16.msra.mxu0 0
    %2480 = vmatprep.subr.bf16.mxu0 0
    %2481 = vmatpush1.bf16.msra.mxu0 0
    %2482 = vmatprep.subr.bf16.mxu0 0
    %2483 = vmatpush1.bf16.msra.mxu0 0
    %2484 = vmatprep.subr.bf16.mxu0 0
    %2485 = vmatpush1.bf16.msra.mxu0 0
    %2486 = vmatprep.subr.bf16.mxu0 0
    %2487 = vmatpush1.bf16.msra.mxu0 0
    %2488 = vmatprep.mubr.bf16.mxu0 0
    %2489 = vmatmul.mubr.bf16.gmra.mrb[0].mxu0 %v2372
    %v2490 = vpop.f32.mrb[0].mxu0
    %v2491 = vadd.f32 0.0, %v2490
    %v2492 = vpop.f32.mrb[0].mxu0
    %v2493 = vadd.f32 0.0, %v2492
    %v2494 = vpop.f32.mrb[0].mxu0
    %v2495 = vpop.f32.mrb[0].mxu0
    %2496 = vdwg.mxu0
    %v2497 = vmax.f32 %v2409, 0.0
    %v2498 = vmax.f32 %v2411, 0.0
    %v2499 = vmax.f32 %v2450, 0.0
    %v2500 = vmax.f32 %v2452, 0.0
    %v2501 = vmax.f32 %v2491, 0.0
    %v2502 = vmax.f32 %v2493, 0.0
    %v2503 = vmin.f32 %v2497, 1.0
    %v2504 = vmin.f32 %v2498, 1.0
    %v2505 = vmin.f32 %v2499, 1.0
    %v2506 = vmin.f32 %v2500, 1.0
    %v2507 = vmin.f32 %v2501, 1.0
    %v2508 = vmin.f32 %v2502, 1.0
    %v2509 = vmul.f32 %v2503, 3.0
    %v2510 = vmul.f32 %v2504, 3.0
    %v2511 = vmul.f32 %v2505, 3.0
    %v2512 = vmul.f32 %v2506, 3.0
    %v2513 = vmul.f32 %v2507, 3.0
    %v2514 = vmul.f32 %v2508, 3.0
    %v2515 = vround.ne.pseudo %v2509
    %v2516 = vround.ne.pseudo %v2510
    %v2517 = vround.ne.pseudo %v2511
    %v2518 = vround.ne.pseudo %v2512
    %v2519 = vround.ne.pseudo %v2513
    %v2520 = vround.ne.pseudo %v2514
    %v2521 = vmul.f32 %v2515, 0.33333334
    %v2522 = vmul.f32 %v2516, 0.33333334
    %v2523 = vmul.f32 %v2517, 0.33333334
    %v2524 = vmul.f32 %v2518, 0.33333334
    %v2525 = vmul.f32 %v2519, 0.33333334
    %v2526 = vmul.f32 %v2520, 0.33333334
    %v2527 = vld [vmem:[%s5] sm:$0xff]
    %2529 = vset.pattern.permute.xlu0 0
    %2530 = vperm.xlu0 %2529, %v2527
    %v2531 = vpop.permute.xlu0 %2530
    %v2533 = vmul.f32 %v2521, %v2531
    %v2534 = vmul.f32 %v2522, %v2531
    %v2535 = vmul.f32 %v2523, %v2531
    %v2536 = vmul.f32 %v2524, %v2531
    %v2537 = vmul.f32 %v2525, %v2531
    %v2538 = vmul.f32 %v2526, %v2531
    %v2539 = vld [vmem:[%s6] sm:$0xff]
    %2541 = vset.pattern.permute.xlu0 0
    %2542 = vperm.xlu0 %2541, %v2539
    %v2543 = vpop.permute.xlu0 %2542
    %v2545 = vadd.f32 %v2533, %v2543
    %v2546 = vadd.f32 %v2534, %v2543
    %v2547 = vadd.f32 %v2535, %v2543
    %v2548 = vadd.f32 %v2536, %v2543
    %v2549 = vadd.f32 %v2537, %v2543
    %v2550 = vadd.f32 %v2538, %v2543
    %2551 = vst [vmem:[#allocation2] sm:$0xff] %v2545
    %2552 = vst [vmem:[#allocation2 + $0x8] sm:$0xff] %v2546
    %2553 = vst [vmem:[#allocation2 + $0x10] sm:$0xff] %v2547
    %2554 = vst [vmem:[#allocation2 + $0x18] sm:$0xff] %v2548
    %2555 = vst [vmem:[#allocation2 + $0x20] sm:$0xff] %v2549
    %2556 = vst [vmem:[#allocation2 + $0x28] sm:$0xff] %v2550
    // Predicated region
    $region30: #{tpu_custom_call.1} parent=1 // pred_check
      _
    $region31: #{tpu_custom_call.1} parent=1 // pred_check_branch
      %2558 = sbr.rel (0) target = $region33
    $region32: #{tpu_custom_call.1} parent=1 // pred_region
      %s2560 = ssub.s32 768, 768
      %2561 = vsyncadd [#allocation3], %s2560
      %s2563 = sshll.u32 [#allocation2], 4
      %s2564 = int_to_ptr.vmem [resolvable:$true] %s2563
      %2566 = dma.vmem_to_hbm [thread:$0]  %s2564, 768, %s7, [#allocation3]
    $region33: #{tpu_custom_call.1} parent=1 // pred_fallthru
      _
    // Predicated region
    $region34: #{tpu_custom_call.1} parent=1 // pred_check
      _
    $region35: #{tpu_custom_call.1} parent=1 // pred_check_branch
      %2568 = sbr.rel (0) target = $region37
    $region36: #{tpu_custom_call.1} parent=1 // pred_region
      %2569 = dma.done [#allocation3], 768
    $region37: #{tpu_custom_call.1} parent=1 // pred_fallthru
      _
    %2570 = vsyncpa [#allocation3], 1

</llo_original>
